<compile_context>
chip_gen: v5e
topology: v5e:2x2
jax: 0.10.0
libtpu: 0.0.40
codegen_flags: <defaults>
</compile_context>

<pallas_src>
import functools

import jax
import jax.numpy as jnp
from jax.experimental import pallas as pl
from jax.experimental.pallas import tpu as pltpu

_NEG_BIG = -1e30      # finite stand-in for -inf; exp(_NEG_BIG) underflows to 0.0
_LANE = 128


def _round_up(x, m):
    return (x + m - 1) // m * m


def _pick_tile(target, n):
    # n is always a multiple of 128 here, so this terminates at >=128 (or n).
    t = min(target, n)
    while n % t:
        t //= 2
    return t


def _default_vmem_limit_bytes():
    """Per-generation scoped-VMEM budget (review: don't hard-code 32 MiB).

    ~3/4 of physical VMEM, capped at 100 MiB:
      v5e/v6e (128 MiB)   -> 96 MiB  (room for bigger tiles / deeper buffering)
      v7x     (64 MiB/TC) -> 48 MiB  (leaves compiler-scratch headroom)
    """
    try:
        cap = pltpu.get_tpu_info().vmem_capacity_bytes
    except Exception:  # conservative fallback if the query is unavailable
        cap = 64 * 1024 * 1024
    return min(int(cap * 3 // 4), 100 * 1024 * 1024)


# ----------------------------------------------------------------------------
# Tiled sparse-GAT attention kernel (all heads fused).
#   grid = (N/tm, N/tn); the column axis is the reduction axis (last,
#   "arbitrary"); the row axis is independent ("parallel").
#   Scalar-prefetched blk_ref[i, j] != 0 gates the whole per-tile body.
# ----------------------------------------------------------------------------
def _attn_kernel(blk_ref, s_src_ref, s_dst_ref, h_ref, adj_ref, out_ref,
                 l_sc, acc_sc, *, alpha, num_heads, head_dim, apply_elu):
    i = pl.program_id(0)
    j = pl.program_id(1)

    @pl.when(j == 0)
    def _init():
        l_sc[...] = jnp.zeros(l_sc.shape, dtype=l_sc.dtype)
        acc_sc[...] = jnp.zeros(acc_sc.shape, dtype=acc_sc.dtype)

    # Block-sparsity skip: a tile with no edge contributes exactly 0 to both
    # l and acc, so the elementwise + exp + matmul body can be skipped.
    @pl.when(blk_ref[i, j] > 0)
    def _compute():
        edge = adj_ref[...] != 0                  # (tm, tn) bool (adj is int8 0/1)
        s_src = s_src_ref[...]                    # (tm, G)   f32
        s_dst_t = s_dst_ref[...]                  # (G, tn)   f32 (pre-transposed)
        h_col = h_ref[...]                        # (tn, G*H) f32

        new_l, contrib = [], []
        for g in range(num_heads):
            # e_ij = exp(-leakyrelu(a1.h_i + a2.h_j)).  The reference applies
            # exp directly with no stabilisation; on edges the argument is at
            # most alpha*|logits| (tiny), so no running max / correction terms
            # are needed.  Non-edges map to _NEG_BIG -> exp underflows to 0.0
            # exactly, which also keeps padded rows/cols at zero contribution.
            logits = s_src[:, g:g + 1] + s_dst_t[g:g + 1, :]        # (tm, tn)
            score = jnp.where(logits > 0, -logits, (-alpha) * logits)
            p = jnp.exp(jnp.where(edge, score, _NEG_BIG))           # (tm, tn)
            new_l.append(jnp.sum(p, axis=-1, keepdims=True))        # (tm, 1)
            contrib.append(
                jnp.dot(p, h_col[:, g * head_dim:(g + 1) * head_dim],
                        preferred_element_type=jnp.float32))        # (tm, hd)

        # single concatenated read-modify-write of the running sums/accumulator
        l_sc[...] += jnp.concatenate(new_l, axis=-1)                # (tm, G)
        acc_sc[...] += jnp.concatenate(contrib, axis=-1)            # (tm, G*H)

    @pl.when(j == pl.num_programs(1) - 1)
    def _finalize():
        l = l_sc[...]                                               # (tm, G)
        # Zero-support rows (incl. padding) have acc == 0, so guarding the
        # divisor yields 0 output (the PyTorch reference would produce 0/0).
        # Exact divide: only runs once per row tile, off the hot path.
        inv = 1.0 / jnp.where(l > 0, l, 1.0)
        tm_ = l.shape[0]
        inv_full = jnp.concatenate(
            [jnp.broadcast_to(inv[:, g:g + 1], (tm_, head_dim))
             for g in range(num_heads)], axis=-1)                   # (tm, G*H)
        out = acc_sc[...] * inv_full
        if apply_elu:
            out = jnp.where(out > 0, out, jnp.exp(out) - 1.0)       # F.elu, alpha=1
        out_ref[...] = out.astype(out_ref.dtype)


# ----------------------------------------------------------------------------
# One fused multi-head sparse-GAT layer.
# ----------------------------------------------------------------------------
def fused_gat_layer(x_pad, w_all, a_src, a_dst, adj_mask, blk_any=None, *,
                    alpha, num_heads, apply_elu, tile_m=512, tile_n=1024,
                    vmem_limit_bytes=None):
    n_pad, _ = x_pad.shape
    gh = w_all.shape[1]
    assert gh % num_heads == 0
    head_dim = gh // num_heads
    assert adj_mask.shape == (n_pad, n_pad)
    if vmem_limit_bytes is None:
        vmem_limit_bytes = _default_vmem_limit_bytes()

    tm = _pick_tile(tile_m, n_pad)
    tn = _pick_tile(tile_n, n_pad)
    gm, gn = n_pad // tm, n_pad // tn

    # Projection + per-head attention-score halves in plain XLA: K and G*H are
    # tiny (<<1% of FLOPs), so a dedicated pallas_call only adds launch cost.
    hp = jax.lax.Precision.HIGHEST
    h = jnp.dot(x_pad, w_all, precision=hp)                        # (N, G*H) f32
    s_src = jnp.dot(h, a_src, precision=hp)                        # (N, G)
    s_dst_t = jnp.dot(h, a_dst, precision=hp).T                    # (G, N)

    if blk_any is None:
        blk_any = (adj_mask.reshape(gm, tm, gn, tn) != 0).any(axis=(1, 3))
        blk_any = blk_any.astype(jnp.int32)
    assert blk_any.shape == (gm, gn)

    kernel = functools.partial(
        _attn_kernel, alpha=alpha, num_heads=num_heads,
        head_dim=head_dim, apply_elu=apply_elu)

    out = pl.pallas_call(
        kernel,
        grid_spec=pltpu.PrefetchScalarGridSpec(
            num_scalar_prefetch=1,                    # blk_any -> SMEM
            grid=(gm, gn),
            in_specs=[
                pl.BlockSpec((tm, num_heads), lambda i, j, blk: (i, 0)),  # s_src rows
                pl.BlockSpec((num_heads, tn), lambda i, j, blk: (0, j)),  # s_dst^T cols
                pl.BlockSpec((tn, gh), lambda i, j, blk: (j, 0)),         # h col tile
                pl.BlockSpec((tm, tn), lambda i, j, blk: (i, j)),         # adj (int8)
            ],
            out_specs=pl.BlockSpec((tm, gh), lambda i, j, blk: (i, 0)),
            scratch_shapes=[
                pltpu.VMEM((tm, num_heads), jnp.float32),   # running sum  l
                pltpu.VMEM((tm, gh), jnp.float32),          # running accumulator
            ]),
        out_shape=jax.ShapeDtypeStruct((n_pad, gh), jnp.float32),
        compiler_params=pltpu.CompilerParams(
            # Row tiles are independent ("parallel"); column/reduction axis is
            # last and "arbitrary".
            # TODO(synk): on v7x, verify in a profile that the row axis shards
            # across the 2 TensorCores; if Mosaic runs it serially, switch to
            # pltpu.CORE_PARALLEL / an explicit core_map split.
            dimension_semantics=("parallel", "arbitrary"),
            vmem_limit_bytes=vmem_limit_bytes),
    )(blk_any, s_src, s_dst_t, h, adj_mask)
    return out


# ----------------------------------------------------------------------------
# Parameter construction (xavier_normal, gain=1.414 as in the original module)
# and the SpGATVAE forward wrapper.
# ----------------------------------------------------------------------------
def _xavier_normal(key, shape, gain=1.414):
    fan_in, fan_out = shape
    std = gain * (2.0 / (fan_in + fan_out)) ** 0.5
    return std * jax.random.normal(key, shape, dtype=jnp.float32)


def init_spgatvae_params(key, nfeat, nhid, output, nheads):
    params = {"attentions": [], "mu_att": None, "logvar_att": None}
    keys = jax.random.split(key, 2 * nheads + 4)
    for i in range(nheads):
        w = _xavier_normal(keys[2 * i], (nfeat, nhid))
        a = _xavier_normal(keys[2 * i + 1], (1, 2 * nhid)).reshape(2 * nhid, 1)
        params["attentions"].append((w, a))
    w_mu = _xavier_normal(keys[2 * nheads + 0], (nhid * nheads, output))
    a_mu = _xavier_normal(keys[2 * nheads + 1], (1, 2 * output)).reshape(2 * output, 1)
    w_lv = _xavier_normal(keys[2 * nheads + 2], (nhid * nheads, output))
    a_lv = _xavier_normal(keys[2 * nheads + 3], (1, 2 * output)).reshape(2 * output, 1)
    params["mu_att"] = (w_mu, a_mu)
    params["logvar_att"] = (w_lv, a_lv)
    return params


def _stack_heads(heads):
    """heads: list of (W (F,H), a (2H,1)).  Returns W_all (F, G*H) and the
    block-diagonal per-head 'a' halves A_src / A_dst of shape (G*H, G)."""
    g = len(heads)
    _, hdim = heads[0][0].shape
    w_all = jnp.concatenate([w for (w, _) in heads], axis=1)
    a_src = jnp.zeros((g * hdim, g), jnp.float32)
    a_dst = jnp.zeros((g * hdim, g), jnp.float32)
    for idx, (_, a) in enumerate(heads):
        a_src = a_src.at[idx * hdim:(idx + 1) * hdim, idx].set(a[:hdim, 0])
        a_dst = a_dst.at[idx * hdim:(idx + 1) * hdim, idx].set(a[hdim:, 0])
    return w_all, a_src, a_dst


def spgatvae_forward(params, x, adj, *, alpha, tile_m=512, tile_n=1024,
                     vmem_limit_bytes=None):
    """Eval-mode SpGATVAE forward (dropout = identity, z = mu)."""
    n = x.shape[0]
    n_pad = _round_up(n, _LANE)
    if vmem_limit_bytes is None:
        vmem_limit_bytes = _default_vmem_limit_bytes()

    tm = _pick_tile(tile_m, n_pad)
    tn = _pick_tile(tile_n, n_pad)

    # Shared, padded 0/1 adjacency as int8 — the dominant N^2 HBM stream, read
    # exactly once per fused layer; int8 halves the bf16 traffic again.
    adj_bool = jnp.pad(adj != 0, ((0, n_pad - n), (0, n_pad - n)))
    adj_mask = adj_bool.astype(jnp.int8)
    # (N/tm, N/tn) "tile has any edge" table, built once and shared by both
    # layers; empty tiles skip all in-kernel work.
    blk_any = adj_bool.reshape(n_pad // tm, tm, n_pad // tn, tn)
    blk_any = blk_any.any(axis=(1, 3)).astype(jnp.int32)

    x_pad = jnp.pad(x.astype(jnp.float32), ((0, n_pad - n), (0, 0)))

    # Layer 1: all attention heads fused; output is already the concatenation.
    w1, a1_src, a1_dst = _stack_heads(params["attentions"])
    h1 = fused_gat_layer(x_pad, w1, a1_src, a1_dst, adj_mask, blk_any,
                         alpha=alpha, num_heads=len(params["attentions"]),
                         apply_elu=True, tile_m=tm, tile_n=tn,
                         vmem_limit_bytes=vmem_limit_bytes)

    # Layer 2: mu and logvar heads fused in one adj pass, concat=False (no ELU).
    w2, a2_src, a2_dst = _stack_heads([params["mu_att"], params["logvar_att"]])
    out2 = fused_gat_layer(h1, w2, a2_src, a2_dst, adj_mask, blk_any,
                           alpha=alpha, num_heads=2, apply_elu=False,
                           tile_m=tm, tile_n=tn,
                           vmem_limit_bytes=vmem_limit_bytes)

    out_dim = params["mu_att"][0].shape[1]
    mu = out2[:n, :out_dim]
    logvar = out2[:n, out_dim:]
    z = mu  # eval-mode reparameterize returns mu
    # TODO(synk): training-mode dropout and gaussian reparameterization noise
    #             are not implemented (eval-mode forward only).
    return z, mu, logvar


# ----------------------------------------------------------------------------
# Pure-JAX reference (dense formulation) for correctness checking.
# ----------------------------------------------------------------------------
def _gat_layer_ref(x, heads, adj, alpha, concat):
    mask = adj != 0
    outs = []
    for (w, a) in heads:
        h = jnp.dot(x, w)
        hd = w.shape[1]
        logits = jnp.dot(h, a[:hd]) + jnp.dot(h, a[hd:]).T
        lrelu = jnp.where(logits > 0, logits, alpha * logits)
        e = jnp.where(mask, jnp.exp(-lrelu), 0.0)
        rowsum = jnp.sum(e, axis=-1, keepdims=True)
        out = jnp.dot(e, h) / jnp.where(rowsum > 0, rowsum, 1.0)
        if concat:
            out = jnp.where(out > 0, out, jnp.exp(out) - 1.0)
        outs.append(out)
    return jnp.concatenate(outs, axis=1)


def _spgatvae_ref(params, x, adj, alpha):
    with jax.default_matmul_precision("float32"):
        x1 = _gat_layer_ref(x, params["attentions"], adj, alpha, True)
        mu = _gat_layer_ref(x1, [params["mu_att"]], adj, alpha, False)
        logvar = _gat_layer_ref(x1, [params["logvar_att"]], adj, alpha, False)
    return mu, mu, logvar


if __name__ == "__main__":
    NFEAT, NHID, OUTPUT, NHEADS = 32, 8, 8, 4
    ALPHA = 0.2        # leaky-relu slope
    DROPOUT = 0.6      # unused in eval-mode forward

    key = jax.random.PRNGKey(0)
    k_param, k_x1, k_a1, k_x2, k_a2 = jax.random.split(key, 5)
    params = init_spgatvae_params(k_param, NFEAT, NHID, OUTPUT, NHEADS)

    def run_case(kx, ka, n, tile_m, tile_n):
        x = jax.random.normal(kx, (n, NFEAT), dtype=jnp.float32)
        # random sparse adjacency with self loops so every row has support
        adj = (jax.random.uniform(ka, (n, n)) < 0.3).astype(jnp.float32)
        adj = jnp.maximum(adj, jnp.eye(n, dtype=jnp.float32))

        z, mu, logvar = spgatvae_forward(params, x, adj, alpha=ALPHA,
                                         tile_m=tile_m, tile_n=tile_n)
        jax.block_until_ready((z, mu, logvar))

        assert z.shape == (n, OUTPUT)
        assert mu.shape == (n, OUTPUT)
        assert logvar.shape == (n, OUTPUT)
        assert bool(jnp.all(jnp.isfinite(z)))
        assert bool(jnp.all(jnp.isfinite(logvar)))

        _, mu_ref, lv_ref = _spgatvae_ref(params, x, adj, ALPHA)
        assert bool(jnp.allclose(mu, mu_ref, rtol=3e-2, atol=3e-3)), "mu mismatch"
        assert bool(jnp.allclose(logvar, lv_ref, rtol=3e-2, atol=3e-3)), "logvar mismatch"

    # single-tile path: N=16 pads to one 128x128 block (default big tiles clamp)
    run_case(k_x1, k_a1, 16, 512, 1024)
    # multi-tile path: N=200 pads to 256 with 128x128 tiles -> 2x2 grid,
    # exercising padding, column-tile accumulation and the block-skip table.
    run_case(k_x2, k_a2, 200, 128, 128)

    print("KERNEL_OK")
</pallas_src>

<mosaic_0001>
module attributes {stable_mosaic.version = 11 : i64} {
  func.func @_attn_kernel(%arg0: i32, %arg1: i32, %arg2: memref<1x1xi32, #tpu.memory_space<smem>>, %arg3: memref<128x4xf32, #tpu.memory_space<vmem>>, %arg4: memref<4x128xf32, #tpu.memory_space<vmem>>, %arg5: memref<128x32xf32, #tpu.memory_space<vmem>>, %arg6: memref<128x128xi8, #tpu.memory_space<vmem>>, %arg7: memref<128x32xf32, #tpu.memory_space<vmem>>, %arg8: memref<128x4xf32, #tpu.memory_space<vmem>>, %arg9: memref<128x32xf32, #tpu.memory_space<vmem>>) attributes {dimension_semantics = [#tpu.dimension_semantics<parallel>, #tpu.dimension_semantics<arbitrary>], iteration_bounds = array<i64: 1, 1>, scalar_prefetch = 1 : i64, scratch_operands = 2 : i64, tpu.core_type = #tpu.core_type<tc>, window_params = [{transform_indices = @transform_0, window_bounds = array<i64: 128, 4>}, {transform_indices = @transform_1, window_bounds = array<i64: 4, 128>}, {transform_indices = @transform_2, window_bounds = array<i64: 128, 32>}, {transform_indices = @transform_3, window_bounds = array<i64: 128, 128>}, {transform_indices = @transform_4, window_bounds = array<i64: 128, 32>}]} {
    %c0_i32 = arith.constant 0 : i32
    %0 = arith.cmpi eq, %arg1, %c0_i32 : i32
    %1 = arith.extui %0 : i1 to i32
    %c0_i32_0 = arith.constant 0 : i32
    %2 = arith.cmpi ne, %1, %c0_i32_0 : i32
    scf.if %2 {
      %cst = arith.constant 0.000000e+00 : f32
      %12 = vector.broadcast %cst : f32 to vector<128x4xf32>
      %c0 = arith.constant 0 : index
      %c0_5 = arith.constant 0 : index
      %13 = vector.load %arg8[%c0, %c0_5] : memref<128x4xf32, #tpu.memory_space<vmem>>, vector<128x4xf32>
      tpu.vector_store %arg8[%c0, %c0_5], %12 {strides = array<i32>} : memref<128x4xf32, #tpu.memory_space<vmem>>, vector<128x4xf32>,
      %cst_6 = arith.constant 0.000000e+00 : f32
      %14 = vector.broadcast %cst_6 : f32 to vector<128x32xf32>
      %c0_7 = arith.constant 0 : index
      %c0_8 = arith.constant 0 : index
      %15 = vector.load %arg9[%c0_7, %c0_8] : memref<128x32xf32, #tpu.memory_space<vmem>>, vector<128x32xf32>
      tpu.vector_store %arg9[%c0_7, %c0_8], %14 {strides = array<i32>} : memref<128x32xf32, #tpu.memory_space<vmem>>, vector<128x32xf32>,
    } else {
    }
    %3 = arith.index_cast %arg0 : i32 to index
    %4 = arith.index_cast %arg1 : i32 to index
    %5 = memref.load %arg2[%3, %4] : memref<1x1xi32, #tpu.memory_space<smem>>
    %c0_i32_1 = arith.constant 0 : i32
    %6 = arith.cmpi sgt, %5, %c0_i32_1 : i32
    %7 = arith.extui %6 : i1 to i32
    %c0_i32_2 = arith.constant 0 : i32
    %8 = arith.cmpi ne, %7, %c0_i32_2 : i32
    scf.if %8 {
      %c0 = arith.constant 0 : index
      %c0_5 = arith.constant 0 : index
      %12 = vector.load %arg6[%c0, %c0_5] : memref<128x128xi8, #tpu.memory_space<vmem>>, vector<128x128xi8>
      %c0_i8 = arith.constant 0 : i8
      %13 = vector.broadcast %c0_i8 : i8 to vector<128x128xi8>
      %14 = arith.cmpi ne, %12, %13 : vector<128x128xi8>
      %c0_6 = arith.constant 0 : index
      %c0_7 = arith.constant 0 : index
      %15 = vector.load %arg3[%c0_6, %c0_7] : memref<128x4xf32, #tpu.memory_space<vmem>>, vector<128x4xf32>
      %c0_8 = arith.constant 0 : index
      %c0_9 = arith.constant 0 : index
      %16 = vector.load %arg4[%c0_8, %c0_9] : memref<4x128xf32, #tpu.memory_space<vmem>>, vector<4x128xf32>
      %c0_10 = arith.constant 0 : index
      %c0_11 = arith.constant 0 : index
      %17 = vector.load %arg5[%c0_10, %c0_11] : memref<128x32xf32, #tpu.memory_space<vmem>>, vector<128x32xf32>
      %18 = vector.extract_strided_slice %15 {offsets = [0, 0], sizes = [128, 1], strides = [1, 1]} : vector<128x4xf32> to vector<128x1xf32>
      %19 = vector.extract_strided_slice %16 {offsets = [0, 0], sizes = [1, 128], strides = [1, 1]} : vector<4x128xf32> to vector<1x128xf32>
      %20 = vector.broadcast %18 : vector<128x1xf32> to vector<128x128xf32>
      %21 = vector.broadcast %19 : vector<1x128xf32> to vector<128x128xf32>
      %22 = arith.addf %20, %21 : vector<128x128xf32>
      %cst = arith.constant 0.000000e+00 : f32
      %23 = vector.broadcast %cst : f32 to vector<128x128xf32>
      %24 = arith.cmpf ogt, %22, %23 : vector<128x128xf32>
      %cst_12 = arith.constant 0.000000e+00 : f32
      %25 = vector.broadcast %cst_12 : f32 to vector<128x128xf32>
      %26 = arith.subf %25, %22 : vector<128x128xf32>
      %cst_13 = arith.constant -2.000000e-01 : f32
      %27 = vector.broadcast %cst_13 : f32 to vector<128x128xf32>
      %28 = arith.mulf %27, %22 : vector<128x128xf32>
      %29 = arith.select %24, %26, %28 : vector<128x128xi1>, vector<128x128xf32>
      %cst_14 = arith.constant -1.000000e+30 : f32
      %30 = vector.broadcast %cst_14 : f32 to vector<128x128xf32>
      %31 = arith.select %14, %29, %30 : vector<128x128xi1>, vector<128x128xf32>
      %32 = math.exp %31 : vector<128x128xf32>
      %cst_15 = arith.constant dense<0.000000e+00> : vector<128xf32>
      %33 = vector.multi_reduction <add>, %32, %cst_15 [1] : vector<128x128xf32> to vector<128xf32>
      %34 = vector.shape_cast %33 : vector<128xf32> to vector<128x1xf32>
      %35 = vector.extract_strided_slice %17 {offsets = [0, 0], sizes = [128, 8], strides = [1, 1]} : vector<128x32xf32> to vector<128x8xf32>
      %cst_16 = arith.constant dense<0.000000e+00> : vector<128x8xf32>
      %36 = tpu.matmul %32, %35, %cst_16 {dimension_numbers = #tpu.dot_dimension_numbers<[1], [0], [0], [1], [0, 0, 1, 1], [], []>} : vector<128x128xf32>, vector<128x8xf32>, vector<128x8xf32> -> vector<128x8xf32>
      %37 = vector.extract_strided_slice %15 {offsets = [0, 1], sizes = [128, 1], strides = [1, 1]} : vector<128x4xf32> to vector<128x1xf32>
      %38 = vector.extract_strided_slice %16 {offsets = [1, 0], sizes = [1, 128], strides = [1, 1]} : vector<4x128xf32> to vector<1x128xf32>
      %39 = vector.broadcast %37 : vector<128x1xf32> to vector<128x128xf32>
      %40 = vector.broadcast %38 : vector<1x128xf32> to vector<128x128xf32>
      %41 = arith.addf %39, %40 : vector<128x128xf32>
      %cst_17 = arith.constant 0.000000e+00 : f32
      %42 = vector.broadcast %cst_17 : f32 to vector<128x128xf32>
      %43 = arith.cmpf ogt, %41, %42 : vector<128x128xf32>
      %cst_18 = arith.constant 0.000000e+00 : f32
      %44 = vector.broadcast %cst_18 : f32 to vector<128x128xf32>
      %45 = arith.subf %44, %41 : vector<128x128xf32>
      %cst_19 = arith.constant -2.000000e-01 : f32
      %46 = vector.broadcast %cst_19 : f32 to vector<128x128xf32>
      %47 = arith.mulf %46, %41 : vector<128x128xf32>
      %48 = arith.select %43, %45, %47 : vector<128x128xi1>, vector<128x128xf32>
      %cst_20 = arith.constant -1.000000e+30 : f32
      %49 = vector.broadcast %cst_20 : f32 to vector<128x128xf32>
      %50 = arith.select %14, %48, %49 : vector<128x128xi1>, vector<128x128xf32>
      %51 = math.exp %50 : vector<128x128xf32>
      %cst_21 = arith.constant dense<0.000000e+00> : vector<128xf32>
      %52 = vector.multi_reduction <add>, %51, %cst_21 [1] : vector<128x128xf32> to vector<128xf32>
      %53 = vector.shape_cast %52 : vector<128xf32> to vector<128x1xf32>
      %54 = vector.extract_strided_slice %17 {offsets = [0, 8], sizes = [128, 8], strides = [1, 1]} : vector<128x32xf32> to vector<128x8xf32>
      %cst_22 = arith.constant dense<0.000000e+00> : vector<128x8xf32>
      %55 = tpu.matmul %51, %54, %cst_22 {dimension_numbers = #tpu.dot_dimension_numbers<[1], [0], [0], [1], [0, 0, 1, 1], [], []>} : vector<128x128xf32>, vector<128x8xf32>, vector<128x8xf32> -> vector<128x8xf32>
      %56 = vector.extract_strided_slice %15 {offsets = [0, 2], sizes = [128, 1], strides = [1, 1]} : vector<128x4xf32> to vector<128x1xf32>
      %57 = vector.extract_strided_slice %16 {offsets = [2, 0], sizes = [1, 128], strides = [1, 1]} : vector<4x128xf32> to vector<1x128xf32>
      %58 = vector.broadcast %56 : vector<128x1xf32> to vector<128x128xf32>
      %59 = vector.broadcast %57 : vector<1x128xf32> to vector<128x128xf32>
      %60 = arith.addf %58, %59 : vector<128x128xf32>
      %cst_23 = arith.constant 0.000000e+00 : f32
      %61 = vector.broadcast %cst_23 : f32 to vector<128x128xf32>
      %62 = arith.cmpf ogt, %60, %61 : vector<128x128xf32>
      %cst_24 = arith.constant 0.000000e+00 : f32
      %63 = vector.broadcast %cst_24 : f32 to vector<128x128xf32>
      %64 = arith.subf %63, %60 : vector<128x128xf32>
      %cst_25 = arith.constant -2.000000e-01 : f32
      %65 = vector.broadcast %cst_25 : f32 to vector<128x128xf32>
      %66 = arith.mulf %65, %60 : vector<128x128xf32>
      %67 = arith.select %62, %64, %66 : vector<128x128xi1>, vector<128x128xf32>
      %cst_26 = arith.constant -1.000000e+30 : f32
      %68 = vector.broadcast %cst_26 : f32 to vector<128x128xf32>
      %69 = arith.select %14, %67, %68 : vector<128x128xi1>, vector<128x128xf32>
      %70 = math.exp %69 : vector<128x128xf32>
      %cst_27 = arith.constant dense<0.000000e+00> : vector<128xf32>
      %71 = vector.multi_reduction <add>, %70, %cst_27 [1] : vector<128x128xf32> to vector<128xf32>
      %72 = vector.shape_cast %71 : vector<128xf32> to vector<128x1xf32>
      %73 = vector.extract_strided_slice %17 {offsets = [0, 16], sizes = [128, 8], strides = [1, 1]} : vector<128x32xf32> to vector<128x8xf32>
      %cst_28 = arith.constant dense<0.000000e+00> : vector<128x8xf32>
      %74 = tpu.matmul %70, %73, %cst_28 {dimension_numbers = #tpu.dot_dimension_numbers<[1], [0], [0], [1], [0, 0, 1, 1], [], []>} : vector<128x128xf32>, vector<128x8xf32>, vector<128x8xf32> -> vector<128x8xf32>
      %75 = vector.extract_strided_slice %15 {offsets = [0, 3], sizes = [128, 1], strides = [1, 1]} : vector<128x4xf32> to vector<128x1xf32>
      %76 = vector.extract_strided_slice %16 {offsets = [3, 0], sizes = [1, 128], strides = [1, 1]} : vector<4x128xf32> to vector<1x128xf32>
      %77 = vector.broadcast %75 : vector<128x1xf32> to vector<128x128xf32>
      %78 = vector.broadcast %76 : vector<1x128xf32> to vector<128x128xf32>
      %79 = arith.addf %77, %78 : vector<128x128xf32>
      %cst_29 = arith.constant 0.000000e+00 : f32
      %80 = vector.broadcast %cst_29 : f32 to vector<128x128xf32>
      %81 = arith.cmpf ogt, %79, %80 : vector<128x128xf32>
      %cst_30 = arith.constant 0.000000e+00 : f32
      %82 = vector.broadcast %cst_30 : f32 to vector<128x128xf32>
      %83 = arith.subf %82, %79 : vector<128x128xf32>
      %cst_31 = arith.constant -2.000000e-01 : f32
      %84 = vector.broadcast %cst_31 : f32 to vector<128x128xf32>
      %85 = arith.mulf %84, %79 : vector<128x128xf32>
      %86 = arith.select %81, %83, %85 : vector<128x128xi1>, vector<128x128xf32>
      %cst_32 = arith.constant -1.000000e+30 : f32
      %87 = vector.broadcast %cst_32 : f32 to vector<128x128xf32>
      %88 = arith.select %14, %86, %87 : vector<128x128xi1>, vector<128x128xf32>
      %89 = math.exp %88 : vector<128x128xf32>
      %cst_33 = arith.constant dense<0.000000e+00> : vector<128xf32>
      %90 = vector.multi_reduction <add>, %89, %cst_33 [1] : vector<128x128xf32> to vector<128xf32>
      %91 = vector.shape_cast %90 : vector<128xf32> to vector<128x1xf32>
      %92 = vector.extract_strided_slice %17 {offsets = [0, 24], sizes = [128, 8], strides = [1, 1]} : vector<128x32xf32> to vector<128x8xf32>
      %cst_34 = arith.constant dense<0.000000e+00> : vector<128x8xf32>
      %93 = tpu.matmul %89, %92, %cst_34 {dimension_numbers = #tpu.dot_dimension_numbers<[1], [0], [0], [1], [0, 0, 1, 1], [], []>} : vector<128x128xf32>, vector<128x8xf32>, vector<128x8xf32> -> vector<128x8xf32>
      %c0_35 = arith.constant 0 : index
      %c0_36 = arith.constant 0 : index
      %94 = vector.load %arg8[%c0_35, %c0_36] : memref<128x4xf32, #tpu.memory_space<vmem>>, vector<128x4xf32>
      %95 = tpu.concatenate %34, %53, %72, %91 in 1 : vector<128x1xf32>, vector<128x1xf32>, vector<128x1xf32>, vector<128x1xf32> -> vector<128x4xf32>
      %96 = arith.addf %94, %95 : vector<128x4xf32>
      %c0_37 = arith.constant 0 : index
      %c0_38 = arith.constant 0 : index
      %97 = vector.load %arg8[%c0_37, %c0_38] : memref<128x4xf32, #tpu.memory_space<vmem>>, vector<128x4xf32>
      tpu.vector_store %arg8[%c0_37, %c0_38], %96 {strides = array<i32>} : memref<128x4xf32, #tpu.memory_space<vmem>>, vector<128x4xf32>,
      %c0_39 = arith.constant 0 : index
      %c0_40 = arith.constant 0 : index
      %98 = vector.load %arg9[%c0_39, %c0_40] : memref<128x32xf32, #tpu.memory_space<vmem>>, vector<128x32xf32>
      %99 = tpu.concatenate %36, %55, %74, %93 in 1 : vector<128x8xf32>, vector<128x8xf32>, vector<128x8xf32>, vector<128x8xf32> -> vector<128x32xf32>
      %100 = arith.addf %98, %99 : vector<128x32xf32>
      %c0_41 = arith.constant 0 : index
      %c0_42 = arith.constant 0 : index
      %101 = vector.load %arg9[%c0_41, %c0_42] : memref<128x32xf32, #tpu.memory_space<vmem>>, vector<128x32xf32>
      tpu.vector_store %arg9[%c0_41, %c0_42], %100 {strides = array<i32>} : memref<128x32xf32, #tpu.memory_space<vmem>>, vector<128x32xf32>,
    } else {
    }
    %c0_i32_3 = arith.constant 0 : i32
    %9 = arith.cmpi eq, %arg1, %c0_i32_3 : i32
    %10 = arith.extui %9 : i1 to i32
    %c0_i32_4 = arith.constant 0 : i32
    %11 = arith.cmpi ne, %10, %c0_i32_4 : i32
    scf.if %11 {
      %c0 = arith.constant 0 : index
      %c0_5 = arith.constant 0 : index
      %12 = vector.load %arg8[%c0, %c0_5] : memref<128x4xf32, #tpu.memory_space<vmem>>, vector<128x4xf32>
      %cst = arith.constant 0.000000e+00 : f32
      %13 = vector.broadcast %cst : f32 to vector<128x4xf32>
      %14 = arith.cmpf ogt, %12, %13 : vector<128x4xf32>
      %cst_6 = arith.constant 1.000000e+00 : f32
      %15 = vector.broadcast %cst_6 : f32 to vector<128x4xf32>
      %16 = arith.select %14, %12, %15 : vector<128x4xi1>, vector<128x4xf32>
      %cst_7 = arith.constant 1.000000e+00 : f32
      %17 = vector.broadcast %cst_7 : f32 to vector<128x4xf32>
      %18 = arith.divf %17, %16 : vector<128x4xf32>
      %19 = vector.extract_strided_slice %18 {offsets = [0, 0], sizes = [128, 1], strides = [1, 1]} : vector<128x4xf32> to vector<128x1xf32>
      %20 = vector.shape_cast %19 : vector<128x1xf32> to vector<128x1xf32>
      %21 = vector.broadcast %20 : vector<128x1xf32> to vector<128x8xf32>
      %22 = vector.extract_strided_slice %18 {offsets = [0, 1], sizes = [128, 1], strides = [1, 1]} : vector<128x4xf32> to vector<128x1xf32>
      %23 = vector.shape_cast %22 : vector<128x1xf32> to vector<128x1xf32>
      %24 = vector.broadcast %23 : vector<128x1xf32> to vector<128x8xf32>
      %25 = vector.extract_strided_slice %18 {offsets = [0, 2], sizes = [128, 1], strides = [1, 1]} : vector<128x4xf32> to vector<128x1xf32>
      %26 = vector.shape_cast %25 : vector<128x1xf32> to vector<128x1xf32>
      %27 = vector.broadcast %26 : vector<128x1xf32> to vector<128x8xf32>
      %28 = vector.extract_strided_slice %18 {offsets = [0, 3], sizes = [128, 1], strides = [1, 1]} : vector<128x4xf32> to vector<128x1xf32>
      %29 = vector.shape_cast %28 : vector<128x1xf32> to vector<128x1xf32>
      %30 = vector.broadcast %29 : vector<128x1xf32> to vector<128x8xf32>
      %31 = tpu.concatenate %21, %24, %27, %30 in 1 : vector<128x8xf32>, vector<128x8xf32>, vector<128x8xf32>, vector<128x8xf32> -> vector<128x32xf32>
      %c0_8 = arith.constant 0 : index
      %c0_9 = arith.constant 0 : index
      %32 = vector.load %arg9[%c0_8, %c0_9] : memref<128x32xf32, #tpu.memory_space<vmem>>, vector<128x32xf32>
      %33 = arith.mulf %32, %31 : vector<128x32xf32>
      %cst_10 = arith.constant 0.000000e+00 : f32
      %34 = vector.broadcast %cst_10 : f32 to vector<128x32xf32>
      %35 = arith.cmpf ogt, %33, %34 : vector<128x32xf32>
      %36 = math.exp %33 : vector<128x32xf32>
      %cst_11 = arith.constant 1.000000e+00 : f32
      %37 = vector.broadcast %cst_11 : f32 to vector<128x32xf32>
      %38 = arith.subf %36, %37 : vector<128x32xf32>
      %39 = arith.select %35, %33, %38 : vector<128x32xi1>, vector<128x32xf32>
      %c0_12 = arith.constant 0 : index
      %c0_13 = arith.constant 0 : index
      %40 = vector.load %arg7[%c0_12, %c0_13] : memref<128x32xf32, #tpu.memory_space<vmem>>, vector<128x32xf32>
      tpu.vector_store %arg7[%c0_12, %c0_13], %39 {strides = array<i32>} : memref<128x32xf32, #tpu.memory_space<vmem>>, vector<128x32xf32>,
    } else {
    }
    return
  }
  func.func @transform_0(%arg0: i32, %arg1: i32, %arg2: memref<1x1xi32, #tpu.memory_space<smem>>) -> (i32, i32) {
    %c0_i32 = arith.constant 0 : i32
    %c0_i32_0 = arith.constant 0 : i32
    return %arg0, %c0_i32 : i32, i32
  }
  func.func @transform_1(%arg0: i32, %arg1: i32, %arg2: memref<1x1xi32, #tpu.memory_space<smem>>) -> (i32, i32) {
    %c0_i32 = arith.constant 0 : i32
    %c0_i32_0 = arith.constant 0 : i32
    return %c0_i32, %arg1 : i32, i32
  }
  func.func @transform_2(%arg0: i32, %arg1: i32, %arg2: memref<1x1xi32, #tpu.memory_space<smem>>) -> (i32, i32) {
    %c0_i32 = arith.constant 0 : i32
    %c0_i32_0 = arith.constant 0 : i32
    return %arg1, %c0_i32 : i32, i32
  }
  func.func @transform_3(%arg0: i32, %arg1: i32, %arg2: memref<1x1xi32, #tpu.memory_space<smem>>) -> (i32, i32) {
    %c0_i32 = arith.constant 0 : i32
    return %arg0, %arg1 : i32, i32
  }
  func.func @transform_4(%arg0: i32, %arg1: i32, %arg2: memref<1x1xi32, #tpu.memory_space<smem>>) -> (i32, i32) {
    %c0_i32 = arith.constant 0 : i32
    %c0_i32_0 = arith.constant 0 : i32
    return %arg0, %c0_i32 : i32, i32
  }
}

</mosaic_0001>

<llo_original>
// kernel: tpu_custom_call.1
$region0: #{tpu_custom_call.1}
  #allocation0 [shape = 'u32[]', space=smem, size = 0x4, offset = 0x4, fixed_abs, tag = 'smem constant byte address 0x4 - core index']
  #allocation1 [shape = 'u32[72,128]{1,0:T(1,128)}', space=vmem, size = 0x9000, scoped, tag = 'internal scratch']
  #allocation2 [shape = 'f32[128,4]{1,0:T(8,128)}', space=vmem, size = 0x10000, scoped, tag = 'scratch operand']
  #allocation3 [shape = 'f32[128,32]{1,0:T(8,128)}', space=vmem, size = 0x10000, scoped, tag = 'scratch operand']
  #allocation4 [shape = 's32[1]{0}', space=sflag, size = 0x4, scoped, tag = 'scoped memory for tpu_custom_call.1']
  #allocation5 [shape = 's32[1,1]{1,0:T(1,128)S(6)}', space=smem, size = 0x200, scoped, tag = 'prefetched SMEM operand 0']
  %s0 = inlined_call_operand.<no memory space> [shape: s32[1,1], index: 0, kind: input, shape index: {}]
  %s1 = inlined_call_operand.vmem [shape: f32[128,4], index: 1, kind: input, shape index: {}]
  %s2 = inlined_call_operand.vmem [shape: f32[4,128], index: 2, kind: input, shape index: {}]
  %s3 = inlined_call_operand.vmem [shape: f32[128,32], index: 3, kind: input, shape index: {}]
  %s4 = inlined_call_operand.vmem [shape: s8[128,128], index: 4, kind: input, shape index: {}]
  %s5 = inlined_call_operand.vmem [shape: f32[128,32], index: 5, kind: output, shape index: {}]
  %s6 = sld [smem:[#allocation0]]
  $region38: #{tpu_custom_call.1} parent=0
    _
  %s8 = ssub.s32 1, %s6
  %s9 = scalar_select 0, %s8, %s6
  %10 = sst [smem:[#allocation5]] %s0
  // Predicated region
  $region2: #{tpu_custom_call.1} parent=0 // pred_check
    _
  $region3: #{tpu_custom_call.1} parent=0 // pred_check_branch
    %12 = sbr.rel (0) target = $region5
  $region4: #{tpu_custom_call.1} parent=0 // pred_region
    _
  $region5: #{tpu_custom_call.1} parent=0 // pred_fallthru
    _
  // Predicated region
  $region6: #{tpu_custom_call.1} parent=0 // pred_check
    _
  $region7: #{tpu_custom_call.1} parent=0 // pred_check_branch
    %14 = sbr.rel (0) target = $region9
  $region8: #{tpu_custom_call.1} parent=0 // pred_region
    _
  $region9: #{tpu_custom_call.1} parent=0 // pred_fallthru
    _
  // Predicated region
  $region10: #{tpu_custom_call.1} parent=0 // pred_check
    _
  $region11: #{tpu_custom_call.1} parent=0 // pred_check_branch
    %16 = sbr.rel (0) target = $region13
  $region12: #{tpu_custom_call.1} parent=0 // pred_region
    _
  $region13: #{tpu_custom_call.1} parent=0 // pred_fallthru
    _
  // Predicated region
  $region14: #{tpu_custom_call.1} parent=0 // pred_check
    _
  $region15: #{tpu_custom_call.1} parent=0 // pred_check_branch
    %18 = sbr.rel (0) target = $region17
  $region16: #{tpu_custom_call.1} parent=0 // pred_region
    _
  $region17: #{tpu_custom_call.1} parent=0 // pred_fallthru
    _
  %p21 = scmp.eq.s32.totalorder 0, 0
  // Predicated region
  $region18: #{tpu_custom_call.1} parent=0 // pred_check
    %p22 = pneg %p21
  $region19: #{tpu_custom_call.1} parent=0 // pred_check_branch
    %24 = sbr.rel (%p22) target = $region21
  $region20: #{tpu_custom_call.1} parent=0 // pred_region
    %vm25 = vcmask 31744
    %26 = vst.msk [vmem:[#allocation2] sm:$0xff] %vm25, 0.0
    %27 = vst.msk [vmem:[#allocation2 + $0x8] sm:$0xff] %vm25, 0.0
    %28 = vst.msk [vmem:[#allocation2 + $0x10] sm:$0xff] %vm25, 0.0
    %29 = vst.msk [vmem:[#allocation2 + $0x18] sm:$0xff] %vm25, 0.0
    %30 = vst.msk [vmem:[#allocation2 + $0x20] sm:$0xff] %vm25, 0.0
    %31 = vst.msk [vmem:[#allocation2 + $0x28] sm:$0xff] %vm25, 0.0
    %32 = vst.msk [vmem:[#allocation2 + $0x30] sm:$0xff] %vm25, 0.0
    %33 = vst.msk [vmem:[#allocation2 + $0x38] sm:$0xff] %vm25, 0.0
    %34 = vst.msk [vmem:[#allocation2 + $0x40] sm:$0xff] %vm25, 0.0
    %35 = vst.msk [vmem:[#allocation2 + $0x48] sm:$0xff] %vm25, 0.0
    %36 = vst.msk [vmem:[#allocation2 + $0x50] sm:$0xff] %vm25, 0.0
    %37 = vst.msk [vmem:[#allocation2 + $0x58] sm:$0xff] %vm25, 0.0
    %38 = vst.msk [vmem:[#allocation2 + $0x60] sm:$0xff] %vm25, 0.0
    %39 = vst.msk [vmem:[#allocation2 + $0x68] sm:$0xff] %vm25, 0.0
    %40 = vst.msk [vmem:[#allocation2 + $0x70] sm:$0xff] %vm25, 0.0
    %41 = vst.msk [vmem:[#allocation2 + $0x78] sm:$0xff] %vm25, 0.0
    %vm42 = vcmask 261120
    %43 = vst.msk [vmem:[#allocation3] sm:$0xff] %vm42, 0.0
    %44 = vst.msk [vmem:[#allocation3 + $0x8] sm:$0xff] %vm42, 0.0
    %45 = vst.msk [vmem:[#allocation3 + $0x10] sm:$0xff] %vm42, 0.0
    %46 = vst.msk [vmem:[#allocation3 + $0x18] sm:$0xff] %vm42, 0.0
    %47 = vst.msk [vmem:[#allocation3 + $0x20] sm:$0xff] %vm42, 0.0
    %48 = vst.msk [vmem:[#allocation3 + $0x28] sm:$0xff] %vm42, 0.0
    %49 = vst.msk [vmem:[#allocation3 + $0x30] sm:$0xff] %vm42, 0.0
    %50 = vst.msk [vmem:[#allocation3 + $0x38] sm:$0xff] %vm42, 0.0
    %51 = vst.msk [vmem:[#allocation3 + $0x40] sm:$0xff] %vm42, 0.0
    %52 = vst.msk [vmem:[#allocation3 + $0x48] sm:$0xff] %vm42, 0.0
    %53 = vst.msk [vmem:[#allocation3 + $0x50] sm:$0xff] %vm42, 0.0
    %54 = vst.msk [vmem:[#allocation3 + $0x58] sm:$0xff] %vm42, 0.0
    %55 = vst.msk [vmem:[#allocation3 + $0x60] sm:$0xff] %vm42, 0.0
    %56 = vst.msk [vmem:[#allocation3 + $0x68] sm:$0xff] %vm42, 0.0
    %57 = vst.msk [vmem:[#allocation3 + $0x70] sm:$0xff] %vm42, 0.0
    %58 = vst.msk [vmem:[#allocation3 + $0x78] sm:$0xff] %vm42, 0.0
  $region21: #{tpu_custom_call.1} parent=0 // pred_fallthru
    _
  %s59 = sadd.s32 0, 0
  %s60 = smul.u32 %s59, 128
  %s61 = sadd.s32 %s60, 0
  %s62 = sld [smem:[#allocation5 + %s61]]
  %p63 = scmp.gt.s32.totalorder %s62, 0
  // Predicated region
  $region22: #{tpu_custom_call.1} parent=0 // pred_check
    %p64 = pneg %p63
  $region23: #{tpu_custom_call.1} parent=0 // pred_check_branch
    %66 = sbr.rel (%p64) target = $region25
  $region24: #{tpu_custom_call.1} parent=0 // pred_region
    %v67 = vld [vmem:[%s4] sm:$0xff]
    %v68 = vld [vmem:[%s4 + $0x8] sm:$0xff]
    %v69 = vld [vmem:[%s4 + $0x10] sm:$0xff]
    %v70 = vld [vmem:[%s4 + $0x18] sm:$0xff]
    %vm71 = vnez %v67
    %vm72 = vnez %v68
    %vm73 = vnez %v69
    %vm74 = vnez %v70
    %v75 = vld [vmem:[%s1] sm:$0xff]
    %v76 = vld [vmem:[%s1 + $0x8] sm:$0xff]
    %v77 = vld [vmem:[%s1 + $0x10] sm:$0xff]
    %v78 = vld [vmem:[%s1 + $0x18] sm:$0xff]
    %v79 = vld [vmem:[%s1 + $0x20] sm:$0xff]
    %v80 = vld [vmem:[%s1 + $0x28] sm:$0xff]
    %v81 = vld [vmem:[%s1 + $0x30] sm:$0xff]
    %v82 = vld [vmem:[%s1 + $0x38] sm:$0xff]
    %v83 = vld [vmem:[%s1 + $0x40] sm:$0xff]
    %v84 = vld [vmem:[%s1 + $0x48] sm:$0xff]
    %v85 = vld [vmem:[%s1 + $0x50] sm:$0xff]
    %v86 = vld [vmem:[%s1 + $0x58] sm:$0xff]
    %v87 = vld [vmem:[%s1 + $0x60] sm:$0xff]
    %v88 = vld [vmem:[%s1 + $0x68] sm:$0xff]
    %v89 = vld [vmem:[%s1 + $0x70] sm:$0xff]
    %v90 = vld [vmem:[%s1 + $0x78] sm:$0xff]
    %v91 = vld [vmem:[%s2] sm:$0xf]
    %v92 = vld [vmem:[%s3] sm:$0xff]
    %v93 = vld [vmem:[%s3 + $0x8] sm:$0xff]
    %v94 = vld [vmem:[%s3 + $0x10] sm:$0xff]
    %v95 = vld [vmem:[%s3 + $0x18] sm:$0xff]
    %v96 = vld [vmem:[%s3 + $0x20] sm:$0xff]
    %v97 = vld [vmem:[%s3 + $0x28] sm:$0xff]
    %v98 = vld [vmem:[%s3 + $0x30] sm:$0xff]
    %v99 = vld [vmem:[%s3 + $0x38] sm:$0xff]
    %v100 = vld [vmem:[%s3 + $0x40] sm:$0xff]
    %v101 = vld [vmem:[%s3 + $0x48] sm:$0xff]
    %v102 = vld [vmem:[%s3 + $0x50] sm:$0xff]
    %v103 = vld [vmem:[%s3 + $0x58] sm:$0xff]
    %v104 = vld [vmem:[%s3 + $0x60] sm:$0xff]
    %v105 = vld [vmem:[%s3 + $0x68] sm:$0xff]
    %v106 = vld [vmem:[%s3 + $0x70] sm:$0xff]
    %v107 = vld [vmem:[%s3 + $0x78] sm:$0xff]
    %109 = vset.pattern.permute.xlu0 0
    %110 = vperm.xlu0 %109, %v75
    %v111 = vpop.permute.xlu0 %110
    %114 = vset.pattern.permute.xlu0 0
    %115 = vperm.xlu0 %114, %v76
    %v116 = vpop.permute.xlu0 %115
    %119 = vset.pattern.permute.xlu0 0
    %120 = vperm.xlu0 %119, %v77
    %v121 = vpop.permute.xlu0 %120
    %124 = vset.pattern.permute.xlu0 0
    %125 = vperm.xlu0 %124, %v78
    %v126 = vpop.permute.xlu0 %125
    %129 = vset.pattern.permute.xlu0 0
    %130 = vperm.xlu0 %129, %v79
    %v131 = vpop.permute.xlu0 %130
    %134 = vset.pattern.permute.xlu0 0
    %135 = vperm.xlu0 %134, %v80
    %v136 = vpop.permute.xlu0 %135
    %139 = vset.pattern.permute.xlu0 0
    %140 = vperm.xlu0 %139, %v81
    %v141 = vpop.permute.xlu0 %140
    %144 = vset.pattern.permute.xlu0 0
    %145 = vperm.xlu0 %144, %v82
    %v146 = vpop.permute.xlu0 %145
    %149 = vset.pattern.permute.xlu0 0
    %150 = vperm.xlu0 %149, %v83
    %v151 = vpop.permute.xlu0 %150
    %154 = vset.pattern.permute.xlu0 0
    %155 = vperm.xlu0 %154, %v84
    %v156 = vpop.permute.xlu0 %155
    %159 = vset.pattern.permute.xlu0 0
    %160 = vperm.xlu0 %159, %v85
    %v161 = vpop.permute.xlu0 %160
    %164 = vset.pattern.permute.xlu0 0
    %165 = vperm.xlu0 %164, %v86
    %v166 = vpop.permute.xlu0 %165
    %169 = vset.pattern.permute.xlu0 0
    %170 = vperm.xlu0 %169, %v87
    %v171 = vpop.permute.xlu0 %170
    %174 = vset.pattern.permute.xlu0 0
    %175 = vperm.xlu0 %174, %v88
    %v176 = vpop.permute.xlu0 %175
    %179 = vset.pattern.permute.xlu0 0
    %180 = vperm.xlu0 %179, %v89
    %v181 = vpop.permute.xlu0 %180
    %184 = vset.pattern.permute.xlu0 0
    %185 = vperm.xlu0 %184, %v90
    %v186 = vpop.permute.xlu0 %185
    %v188 = vperm.slane %v91, 0
    %v189 = vadd.f32 %v111, %v188
    %v190 = vadd.f32 %v116, %v188
    %v191 = vadd.f32 %v121, %v188
    %v192 = vadd.f32 %v126, %v188
    %v193 = vadd.f32 %v131, %v188
    %v194 = vadd.f32 %v136, %v188
    %v195 = vadd.f32 %v141, %v188
    %v196 = vadd.f32 %v146, %v188
    %v197 = vadd.f32 %v151, %v188
    %v198 = vadd.f32 %v156, %v188
    %v199 = vadd.f32 %v161, %v188
    %v200 = vadd.f32 %v166, %v188
    %v201 = vadd.f32 %v171, %v188
    %v202 = vadd.f32 %v176, %v188
    %v203 = vadd.f32 %v181, %v188
    %v204 = vadd.f32 %v186, %v188
    %vm205 = vcmp.gt.f32.partialorder %v189, 0.0
    %vm206 = vcmp.gt.f32.partialorder %v190, 0.0
    %vm207 = vcmp.gt.f32.partialorder %v191, 0.0
    %vm208 = vcmp.gt.f32.partialorder %v192, 0.0
    %vm209 = vcmp.gt.f32.partialorder %v193, 0.0
    %vm210 = vcmp.gt.f32.partialorder %v194, 0.0
    %vm211 = vcmp.gt.f32.partialorder %v195, 0.0
    %vm212 = vcmp.gt.f32.partialorder %v196, 0.0
    %vm213 = vcmp.gt.f32.partialorder %v197, 0.0
    %vm214 = vcmp.gt.f32.partialorder %v198, 0.0
    %vm215 = vcmp.gt.f32.partialorder %v199, 0.0
    %vm216 = vcmp.gt.f32.partialorder %v200, 0.0
    %vm217 = vcmp.gt.f32.partialorder %v201, 0.0
    %vm218 = vcmp.gt.f32.partialorder %v202, 0.0
    %vm219 = vcmp.gt.f32.partialorder %v203, 0.0
    %vm220 = vcmp.gt.f32.partialorder %v204, 0.0
    %v221 = vsub.f32 0.0, %v189
    %v222 = vsub.f32 0.0, %v190
    %v223 = vsub.f32 0.0, %v191
    %v224 = vsub.f32 0.0, %v192
    %v225 = vsub.f32 0.0, %v193
    %v226 = vsub.f32 0.0, %v194
    %v227 = vsub.f32 0.0, %v195
    %v228 = vsub.f32 0.0, %v196
    %v229 = vsub.f32 0.0, %v197
    %v230 = vsub.f32 0.0, %v198
    %v231 = vsub.f32 0.0, %v199
    %v232 = vsub.f32 0.0, %v200
    %v233 = vsub.f32 0.0, %v201
    %v234 = vsub.f32 0.0, %v202
    %v235 = vsub.f32 0.0, %v203
    %v236 = vsub.f32 0.0, %v204
    %v237 = vmul.f32 %v189, -0.2
    %v238 = vmul.f32 %v190, -0.2
    %v239 = vmul.f32 %v191, -0.2
    %v240 = vmul.f32 %v192, -0.2
    %v241 = vmul.f32 %v193, -0.2
    %v242 = vmul.f32 %v194, -0.2
    %v243 = vmul.f32 %v195, -0.2
    %v244 = vmul.f32 %v196, -0.2
    %v245 = vmul.f32 %v197, -0.2
    %v246 = vmul.f32 %v198, -0.2
    %v247 = vmul.f32 %v199, -0.2
    %v248 = vmul.f32 %v200, -0.2
    %v249 = vmul.f32 %v201, -0.2
    %v250 = vmul.f32 %v202, -0.2
    %v251 = vmul.f32 %v203, -0.2
    %v252 = vmul.f32 %v204, -0.2
    %v253 = vsel %vm205, %v221, %v237
    %v254 = vsel %vm206, %v222, %v238
    %v255 = vsel %vm207, %v223, %v239
    %v256 = vsel %vm208, %v224, %v240
    %v257 = vsel %vm209, %v225, %v241
    %v258 = vsel %vm210, %v226, %v242
    %v259 = vsel %vm211, %v227, %v243
    %v260 = vsel %vm212, %v228, %v244
    %v261 = vsel %vm213, %v229, %v245
    %v262 = vsel %vm214, %v230, %v246
    %v263 = vsel %vm215, %v231, %v247
    %v264 = vsel %vm216, %v232, %v248
    %v265 = vsel %vm217, %v233, %v249
    %v266 = vsel %vm218, %v234, %v250
    %v267 = vsel %vm219, %v235, %v251
    %v268 = vsel %vm220, %v236, %v252
    %v269 = vsel %vm71, 16843009, 0
    %v270 = vsel %vm72, 16843009, 0
    %v271 = vsel %vm73, 16843009, 0
    %v272 = vsel %vm74, 16843009, 0
    %v273 = vunpack.c.0.s8 %v269
    %v274 = vunpack.c.1.s8 %v269
    %v275 = vunpack.c.2.s8 %v269
    %v276 = vunpack.c.3.s8 %v269
    %v277 = vunpack.c.0.s8 %v270
    %v278 = vunpack.c.1.s8 %v270
    %v279 = vunpack.c.2.s8 %v270
    %v280 = vunpack.c.3.s8 %v270
    %v281 = vunpack.c.0.s8 %v271
    %v282 = vunpack.c.1.s8 %v271
    %v283 = vunpack.c.2.s8 %v271
    %v284 = vunpack.c.3.s8 %v271
    %v285 = vunpack.c.0.s8 %v272
    %v286 = vunpack.c.1.s8 %v272
    %v287 = vunpack.c.2.s8 %v272
    %v288 = vunpack.c.3.s8 %v272
    %v289 = vpack.c.b16 %v273, %v273
    %v290 = vpack.c.b8 %v289, %v289
    %v291 = vpack.c.b16 %v274, %v274
    %v292 = vpack.c.b8 %v291, %v291
    %v293 = vpack.c.b16 %v275, %v275
    %v294 = vpack.c.b8 %v293, %v293
    %v295 = vpack.c.b16 %v276, %v276
    %v296 = vpack.c.b8 %v295, %v295
    %v297 = vpack.c.b16 %v277, %v277
    %v298 = vpack.c.b8 %v297, %v297
    %v299 = vpack.c.b16 %v278, %v278
    %v300 = vpack.c.b8 %v299, %v299
    %v301 = vpack.c.b16 %v279, %v279
    %v302 = vpack.c.b8 %v301, %v301
    %v303 = vpack.c.b16 %v280, %v280
    %v304 = vpack.c.b8 %v303, %v303
    %v305 = vpack.c.b16 %v281, %v281
    %v306 = vpack.c.b8 %v305, %v305
    %v307 = vpack.c.b16 %v282, %v282
    %v308 = vpack.c.b8 %v307, %v307
    %v309 = vpack.c.b16 %v283, %v283
    %v310 = vpack.c.b8 %v309, %v309
    %v311 = vpack.c.b16 %v284, %v284
    %v312 = vpack.c.b8 %v311, %v311
    %v313 = vpack.c.b16 %v285, %v285
    %v314 = vpack.c.b8 %v313, %v313
    %v315 = vpack.c.b16 %v286, %v286
    %v316 = vpack.c.b8 %v315, %v315
    %v317 = vpack.c.b16 %v287, %v287
    %v318 = vpack.c.b8 %v317, %v317
    %v319 = vpack.c.b16 %v288, %v288
    %v320 = vpack.c.b8 %v319, %v319
    %vm321 = vnez %v290
    %vm322 = vnez %v292
    %vm323 = vnez %v294
    %vm324 = vnez %v296
    %vm325 = vnez %v298
    %vm326 = vnez %v300
    %vm327 = vnez %v302
    %vm328 = vnez %v304
    %vm329 = vnez %v306
    %vm330 = vnez %v308
    %vm331 = vnez %v310
    %vm332 = vnez %v312
    %vm333 = vnez %v314
    %vm334 = vnez %v316
    %vm335 = vnez %v318
    %vm336 = vnez %v320
    %v337 = vsel %vm321, 16843009, 0
    %v338 = vsel %vm322, 16843009, 0
    %v339 = vsel %vm323, 16843009, 0
    %v340 = vsel %vm324, 16843009, 0
    %v341 = vsel %vm325, 16843009, 0
    %v342 = vsel %vm326, 16843009, 0
    %v343 = vsel %vm327, 16843009, 0
    %v344 = vsel %vm328, 16843009, 0
    %v345 = vsel %vm329, 16843009, 0
    %v346 = vsel %vm330, 16843009, 0
    %v347 = vsel %vm331, 16843009, 0
    %v348 = vsel %vm332, 16843009, 0
    %v349 = vsel %vm333, 16843009, 0
    %v350 = vsel %vm334, 16843009, 0
    %v351 = vsel %vm335, 16843009, 0
    %v352 = vsel %vm336, 16843009, 0
    %v353 = vunpack.c.0.s8 %v337
    %v354 = vunpack.c.0.s8 %v338
    %v355 = vunpack.c.0.s8 %v339
    %v356 = vunpack.c.0.s8 %v340
    %v357 = vunpack.c.0.s8 %v341
    %v358 = vunpack.c.0.s8 %v342
    %v359 = vunpack.c.0.s8 %v343
    %v360 = vunpack.c.0.s8 %v344
    %v361 = vunpack.c.0.s8 %v345
    %v362 = vunpack.c.0.s8 %v346
    %v363 = vunpack.c.0.s8 %v347
    %v364 = vunpack.c.0.s8 %v348
    %v365 = vunpack.c.0.s8 %v349
    %v366 = vunpack.c.0.s8 %v350
    %v367 = vunpack.c.0.s8 %v351
    %v368 = vunpack.c.0.s8 %v352
    %vm369 = vcmp.ne.s32.totalorder %v353, 0
    %vm370 = vcmp.ne.s32.totalorder %v354, 0
    %vm371 = vcmp.ne.s32.totalorder %v355, 0
    %vm372 = vcmp.ne.s32.totalorder %v356, 0
    %vm373 = vcmp.ne.s32.totalorder %v357, 0
    %vm374 = vcmp.ne.s32.totalorder %v358, 0
    %vm375 = vcmp.ne.s32.totalorder %v359, 0
    %vm376 = vcmp.ne.s32.totalorder %v360, 0
    %vm377 = vcmp.ne.s32.totalorder %v361, 0
    %vm378 = vcmp.ne.s32.totalorder %v362, 0
    %vm379 = vcmp.ne.s32.totalorder %v363, 0
    %vm380 = vcmp.ne.s32.totalorder %v364, 0
    %vm381 = vcmp.ne.s32.totalorder %v365, 0
    %vm382 = vcmp.ne.s32.totalorder %v366, 0
    %vm383 = vcmp.ne.s32.totalorder %v367, 0
    %vm384 = vcmp.ne.s32.totalorder %v368, 0
    %v385 = vsel %vm369, %v253, -1e+30
    %v386 = vsel %vm370, %v254, -1e+30
    %v387 = vsel %vm371, %v255, -1e+30
    %v388 = vsel %vm372, %v256, -1e+30
    %v389 = vsel %vm373, %v257, -1e+30
    %v390 = vsel %vm374, %v258, -1e+30
    %v391 = vsel %vm375, %v259, -1e+30
    %v392 = vsel %vm376, %v260, -1e+30
    %v393 = vsel %vm377, %v261, -1e+30
    %v394 = vsel %vm378, %v262, -1e+30
    %v395 = vsel %vm379, %v263, -1e+30
    %v396 = vsel %vm380, %v264, -1e+30
    %v397 = vsel %vm381, %v265, -1e+30
    %v398 = vsel %vm382, %v266, -1e+30
    %v399 = vsel %vm383, %v267, -1e+30
    %v400 = vsel %vm384, %v268, -1e+30
    %v401 = vmul.f32 %v385, 1.442695
    %v402 = vpow.pop %v401
    %v403 = vmul.f32 %v386, 1.442695
    %v404 = vpow.pop %v403
    %v405 = vmul.f32 %v387, 1.442695
    %v406 = vpow.pop %v405
    %v407 = vmul.f32 %v388, 1.442695
    %v408 = vpow.pop %v407
    %v409 = vmul.f32 %v389, 1.442695
    %v410 = vpow.pop %v409
    %v411 = vmul.f32 %v390, 1.442695
    %v412 = vpow.pop %v411
    %v413 = vmul.f32 %v391, 1.442695
    %v414 = vpow.pop %v413
    %v415 = vmul.f32 %v392, 1.442695
    %v416 = vpow.pop %v415
    %v417 = vmul.f32 %v393, 1.442695
    %v418 = vpow.pop %v417
    %v419 = vmul.f32 %v394, 1.442695
    %v420 = vpow.pop %v419
    %v421 = vmul.f32 %v395, 1.442695
    %v422 = vpow.pop %v421
    %v423 = vmul.f32 %v396, 1.442695
    %v424 = vpow.pop %v423
    %v425 = vmul.f32 %v397, 1.442695
    %v426 = vpow.pop %v425
    %v427 = vmul.f32 %v398, 1.442695
    %v428 = vpow.pop %v427
    %v429 = vmul.f32 %v399, 1.442695
    %v430 = vpow.pop %v429
    %v431 = vmul.f32 %v400, 1.442695
    %v432 = vpow.pop %v431
    %433 = vadd.xlane.f32.xlu0 %v402
    %v434 = vpop.xlane.xlu0 %433
    %435 = vadd.xlane.f32.xlu0 %v404
    %v436 = vpop.xlane.xlu0 %435
    %437 = vadd.xlane.f32.xlu0 %v406
    %v438 = vpop.xlane.xlu0 %437
    %439 = vadd.xlane.f32.xlu0 %v408
    %v440 = vpop.xlane.xlu0 %439
    %441 = vadd.xlane.f32.xlu0 %v410
    %v442 = vpop.xlane.xlu0 %441
    %443 = vadd.xlane.f32.xlu0 %v412
    %v444 = vpop.xlane.xlu0 %443
    %445 = vadd.xlane.f32.xlu0 %v414
    %v446 = vpop.xlane.xlu0 %445
    %447 = vadd.xlane.f32.xlu0 %v416
    %v448 = vpop.xlane.xlu0 %447
    %449 = vadd.xlane.f32.xlu0 %v418
    %v450 = vpop.xlane.xlu0 %449
    %451 = vadd.xlane.f32.xlu0 %v420
    %v452 = vpop.xlane.xlu0 %451
    %453 = vadd.xlane.f32.xlu0 %v422
    %v454 = vpop.xlane.xlu0 %453
    %455 = vadd.xlane.f32.xlu0 %v424
    %v456 = vpop.xlane.xlu0 %455
    %457 = vadd.xlane.f32.xlu0 %v426
    %v458 = vpop.xlane.xlu0 %457
    %459 = vadd.xlane.f32.xlu0 %v428
    %v460 = vpop.xlane.xlu0 %459
    %461 = vadd.xlane.f32.xlu0 %v430
    %v462 = vpop.xlane.xlu0 %461
    %463 = vadd.xlane.f32.xlu0 %v432
    %v464 = vpop.xlane.xlu0 %463
    %465 = vmatpush.msra.mxu0 %v107
    %466 = vmatpush.msra.mxu0 %v106
    %467 = vmatpush.msra.mxu0 %v105
    %468 = vmatpush.msra.mxu0 %v104
    %469 = vmatpush.msra.mxu0 %v103
    %470 = vmatpush.msra.mxu0 %v102
    %471 = vmatpush.msra.mxu0 %v101
    %472 = vmatpush.msra.mxu0 %v100
    %473 = vmatpush.msra.mxu0 %v99
    %474 = vmatpush.msra.mxu0 %v98
    %475 = vmatpush.msra.mxu0 %v97
    %476 = vmatpush.msra.mxu0 %v96
    %477 = vmatpush.msra.mxu0 %v95
    %478 = vmatpush.msra.mxu0 %v94
    %479 = vmatpush.msra.mxu0 %v93
    %480 = vmatpush.msra.mxu0 %v92
    %481 = vmatmul.f32.gmra.mxu0 %v402
    %v482 = vpop.f32.mrf.mxu0
    %v483 = vadd.f32 0.0, %v482
    %484 = vmatmul.f32.gmra.mxu0 %v404
    %v485 = vpop.f32.mrf.mxu0
    %v486 = vadd.f32 0.0, %v485
    %487 = vmatmul.f32.gmra.mxu0 %v406
    %v488 = vpop.f32.mrf.mxu0
    %v489 = vadd.f32 0.0, %v488
    %490 = vmatmul.f32.gmra.mxu0 %v408
    %v491 = vpop.f32.mrf.mxu0
    %v492 = vadd.f32 0.0, %v491
    %493 = vmatmul.f32.gmra.mxu0 %v410
    %v494 = vpop.f32.mrf.mxu0
    %v495 = vadd.f32 0.0, %v494
    %496 = vmatmul.f32.gmra.mxu0 %v412
    %v497 = vpop.f32.mrf.mxu0
    %v498 = vadd.f32 0.0, %v497
    %499 = vmatmul.f32.gmra.mxu0 %v414
    %v500 = vpop.f32.mrf.mxu0
    %v501 = vadd.f32 0.0, %v500
    %502 = vmatmul.f32.gmra.mxu0 %v416
    %v503 = vpop.f32.mrf.mxu0
    %v504 = vadd.f32 0.0, %v503
    %505 = vmatmul.f32.gmra.mxu0 %v418
    %v506 = vpop.f32.mrf.mxu0
    %v507 = vadd.f32 0.0, %v506
    %508 = vmatmul.f32.gmra.mxu0 %v420
    %v509 = vpop.f32.mrf.mxu0
    %v510 = vadd.f32 0.0, %v509
    %511 = vmatmul.f32.gmra.mxu0 %v422
    %v512 = vpop.f32.mrf.mxu0
    %v513 = vadd.f32 0.0, %v512
    %514 = vmatmul.f32.gmra.mxu0 %v424
    %v515 = vpop.f32.mrf.mxu0
    %v516 = vadd.f32 0.0, %v515
    %517 = vmatmul.f32.gmra.mxu0 %v426
    %v518 = vpop.f32.mrf.mxu0
    %v519 = vadd.f32 0.0, %v518
    %520 = vmatmul.f32.gmra.mxu0 %v428
    %v521 = vpop.f32.mrf.mxu0
    %v522 = vadd.f32 0.0, %v521
    %523 = vmatmul.f32.gmra.mxu0 %v430
    %v524 = vpop.f32.mrf.mxu0
    %v525 = vadd.f32 0.0, %v524
    %526 = vmatmul.f32.gmra.mxu0 %v432
    %v527 = vpop.f32.mrf.mxu0
    %v528 = vadd.f32 0.0, %v527
    %529 = vdwg.mxu0
    %530 = vset.pattern.permute.xlu0 1
    %531 = vperm.xlu0 %530, %v75
    %v532 = vpop.permute.xlu0 %531
    %534 = vset.pattern.permute.xlu0 1
    %535 = vperm.xlu0 %534, %v76
    %v536 = vpop.permute.xlu0 %535
    %538 = vset.pattern.permute.xlu0 1
    %539 = vperm.xlu0 %538, %v77
    %v540 = vpop.permute.xlu0 %539
    %542 = vset.pattern.permute.xlu0 1
    %543 = vperm.xlu0 %542, %v78
    %v544 = vpop.permute.xlu0 %543
    %546 = vset.pattern.permute.xlu0 1
    %547 = vperm.xlu0 %546, %v79
    %v548 = vpop.permute.xlu0 %547
    %550 = vset.pattern.permute.xlu0 1
    %551 = vperm.xlu0 %550, %v80
    %v552 = vpop.permute.xlu0 %551
    %554 = vset.pattern.permute.xlu0 1
    %555 = vperm.xlu0 %554, %v81
    %v556 = vpop.permute.xlu0 %555
    %558 = vset.pattern.permute.xlu0 1
    %559 = vperm.xlu0 %558, %v82
    %v560 = vpop.permute.xlu0 %559
    %562 = vset.pattern.permute.xlu0 1
    %563 = vperm.xlu0 %562, %v83
    %v564 = vpop.permute.xlu0 %563
    %566 = vset.pattern.permute.xlu0 1
    %567 = vperm.xlu0 %566, %v84
    %v568 = vpop.permute.xlu0 %567
    %570 = vset.pattern.permute.xlu0 1
    %571 = vperm.xlu0 %570, %v85
    %v572 = vpop.permute.xlu0 %571
    %574 = vset.pattern.permute.xlu0 1
    %575 = vperm.xlu0 %574, %v86
    %v576 = vpop.permute.xlu0 %575
    %578 = vset.pattern.permute.xlu0 1
    %579 = vperm.xlu0 %578, %v87
    %v580 = vpop.permute.xlu0 %579
    %582 = vset.pattern.permute.xlu0 1
    %583 = vperm.xlu0 %582, %v88
    %v584 = vpop.permute.xlu0 %583
    %586 = vset.pattern.permute.xlu0 1
    %587 = vperm.xlu0 %586, %v89
    %v588 = vpop.permute.xlu0 %587
    %590 = vset.pattern.permute.xlu0 1
    %591 = vperm.xlu0 %590, %v90
    %v592 = vpop.permute.xlu0 %591
    %v594 = vperm.slane %v91, 1
    %v595 = vadd.f32 %v532, %v594
    %v596 = vadd.f32 %v536, %v594
    %v597 = vadd.f32 %v540, %v594
    %v598 = vadd.f32 %v544, %v594
    %v599 = vadd.f32 %v548, %v594
    %v600 = vadd.f32 %v552, %v594
    %v601 = vadd.f32 %v556, %v594
    %v602 = vadd.f32 %v560, %v594
    %v603 = vadd.f32 %v564, %v594
    %v604 = vadd.f32 %v568, %v594
    %v605 = vadd.f32 %v572, %v594
    %v606 = vadd.f32 %v576, %v594
    %v607 = vadd.f32 %v580, %v594
    %v608 = vadd.f32 %v584, %v594
    %v609 = vadd.f32 %v588, %v594
    %v610 = vadd.f32 %v592, %v594
    %vm611 = vcmp.gt.f32.partialorder %v595, 0.0
    %vm612 = vcmp.gt.f32.partialorder %v596, 0.0
    %vm613 = vcmp.gt.f32.partialorder %v597, 0.0
    %vm614 = vcmp.gt.f32.partialorder %v598, 0.0
    %vm615 = vcmp.gt.f32.partialorder %v599, 0.0
    %vm616 = vcmp.gt.f32.partialorder %v600, 0.0
    %vm617 = vcmp.gt.f32.partialorder %v601, 0.0
    %vm618 = vcmp.gt.f32.partialorder %v602, 0.0
    %vm619 = vcmp.gt.f32.partialorder %v603, 0.0
    %vm620 = vcmp.gt.f32.partialorder %v604, 0.0
    %vm621 = vcmp.gt.f32.partialorder %v605, 0.0
    %vm622 = vcmp.gt.f32.partialorder %v606, 0.0
    %vm623 = vcmp.gt.f32.partialorder %v607, 0.0
    %vm624 = vcmp.gt.f32.partialorder %v608, 0.0
    %vm625 = vcmp.gt.f32.partialorder %v609, 0.0
    %vm626 = vcmp.gt.f32.partialorder %v610, 0.0
    %v627 = vsub.f32 0.0, %v595
    %v628 = vsub.f32 0.0, %v596
    %v629 = vsub.f32 0.0, %v597
    %v630 = vsub.f32 0.0, %v598
    %v631 = vsub.f32 0.0, %v599
    %v632 = vsub.f32 0.0, %v600
    %v633 = vsub.f32 0.0, %v601
    %v634 = vsub.f32 0.0, %v602
    %v635 = vsub.f32 0.0, %v603
    %v636 = vsub.f32 0.0, %v604
    %v637 = vsub.f32 0.0, %v605
    %v638 = vsub.f32 0.0, %v606
    %v639 = vsub.f32 0.0, %v607
    %v640 = vsub.f32 0.0, %v608
    %v641 = vsub.f32 0.0, %v609
    %v642 = vsub.f32 0.0, %v610
    %v643 = vmul.f32 %v595, -0.2
    %v644 = vmul.f32 %v596, -0.2
    %v645 = vmul.f32 %v597, -0.2
    %v646 = vmul.f32 %v598, -0.2
    %v647 = vmul.f32 %v599, -0.2
    %v648 = vmul.f32 %v600, -0.2
    %v649 = vmul.f32 %v601, -0.2
    %v650 = vmul.f32 %v602, -0.2
    %v651 = vmul.f32 %v603, -0.2
    %v652 = vmul.f32 %v604, -0.2
    %v653 = vmul.f32 %v605, -0.2
    %v654 = vmul.f32 %v606, -0.2
    %v655 = vmul.f32 %v607, -0.2
    %v656 = vmul.f32 %v608, -0.2
    %v657 = vmul.f32 %v609, -0.2
    %v658 = vmul.f32 %v610, -0.2
    %v659 = vsel %vm611, %v627, %v643
    %v660 = vsel %vm612, %v628, %v644
    %v661 = vsel %vm613, %v629, %v645
    %v662 = vsel %vm614, %v630, %v646
    %v663 = vsel %vm615, %v631, %v647
    %v664 = vsel %vm616, %v632, %v648
    %v665 = vsel %vm617, %v633, %v649
    %v666 = vsel %vm618, %v634, %v650
    %v667 = vsel %vm619, %v635, %v651
    %v668 = vsel %vm620, %v636, %v652
    %v669 = vsel %vm621, %v637, %v653
    %v670 = vsel %vm622, %v638, %v654
    %v671 = vsel %vm623, %v639, %v655
    %v672 = vsel %vm624, %v640, %v656
    %v673 = vsel %vm625, %v641, %v657
    %v674 = vsel %vm626, %v642, %v658
    %v675 = vsel %vm369, %v659, -1e+30
    %v676 = vsel %vm370, %v660, -1e+30
    %v677 = vsel %vm371, %v661, -1e+30
    %v678 = vsel %vm372, %v662, -1e+30
    %v679 = vsel %vm373, %v663, -1e+30
    %v680 = vsel %vm374, %v664, -1e+30
    %v681 = vsel %vm375, %v665, -1e+30
    %v682 = vsel %vm376, %v666, -1e+30
    %v683 = vsel %vm377, %v667, -1e+30
    %v684 = vsel %vm378, %v668, -1e+30
    %v685 = vsel %vm379, %v669, -1e+30
    %v686 = vsel %vm380, %v670, -1e+30
    %v687 = vsel %vm381, %v671, -1e+30
    %v688 = vsel %vm382, %v672, -1e+30
    %v689 = vsel %vm383, %v673, -1e+30
    %v690 = vsel %vm384, %v674, -1e+30
    %v691 = vmul.f32 %v675, 1.442695
    %v692 = vpow.pop %v691
    %v693 = vmul.f32 %v676, 1.442695
    %v694 = vpow.pop %v693
    %v695 = vmul.f32 %v677, 1.442695
    %v696 = vpow.pop %v695
    %v697 = vmul.f32 %v678, 1.442695
    %v698 = vpow.pop %v697
    %v699 = vmul.f32 %v679, 1.442695
    %v700 = vpow.pop %v699
    %v701 = vmul.f32 %v680, 1.442695
    %v702 = vpow.pop %v701
    %v703 = vmul.f32 %v681, 1.442695
    %v704 = vpow.pop %v703
    %v705 = vmul.f32 %v682, 1.442695
    %v706 = vpow.pop %v705
    %v707 = vmul.f32 %v683, 1.442695
    %v708 = vpow.pop %v707
    %v709 = vmul.f32 %v684, 1.442695
    %v710 = vpow.pop %v709
    %v711 = vmul.f32 %v685, 1.442695
    %v712 = vpow.pop %v711
    %v713 = vmul.f32 %v686, 1.442695
    %v714 = vpow.pop %v713
    %v715 = vmul.f32 %v687, 1.442695
    %v716 = vpow.pop %v715
    %v717 = vmul.f32 %v688, 1.442695
    %v718 = vpow.pop %v717
    %v719 = vmul.f32 %v689, 1.442695
    %v720 = vpow.pop %v719
    %v721 = vmul.f32 %v690, 1.442695
    %v722 = vpow.pop %v721
    %723 = vadd.xlane.f32.xlu0 %v692
    %v724 = vpop.xlane.xlu0 %723
    %725 = vadd.xlane.f32.xlu0 %v694
    %v726 = vpop.xlane.xlu0 %725
    %727 = vadd.xlane.f32.xlu0 %v696
    %v728 = vpop.xlane.xlu0 %727
    %729 = vadd.xlane.f32.xlu0 %v698
    %v730 = vpop.xlane.xlu0 %729
    %731 = vadd.xlane.f32.xlu0 %v700
    %v732 = vpop.xlane.xlu0 %731
    %733 = vadd.xlane.f32.xlu0 %v702
    %v734 = vpop.xlane.xlu0 %733
    %735 = vadd.xlane.f32.xlu0 %v704
    %v736 = vpop.xlane.xlu0 %735
    %737 = vadd.xlane.f32.xlu0 %v706
    %v738 = vpop.xlane.xlu0 %737
    %739 = vadd.xlane.f32.xlu0 %v708
    %v740 = vpop.xlane.xlu0 %739
    %741 = vadd.xlane.f32.xlu0 %v710
    %v742 = vpop.xlane.xlu0 %741
    %743 = vadd.xlane.f32.xlu0 %v712
    %v744 = vpop.xlane.xlu0 %743
    %745 = vadd.xlane.f32.xlu0 %v714
    %v746 = vpop.xlane.xlu0 %745
    %747 = vadd.xlane.f32.xlu0 %v716
    %v748 = vpop.xlane.xlu0 %747
    %749 = vadd.xlane.f32.xlu0 %v718
    %v750 = vpop.xlane.xlu0 %749
    %751 = vadd.xlane.f32.xlu0 %v720
    %v752 = vpop.xlane.xlu0 %751
    %753 = vadd.xlane.f32.xlu0 %v722
    %v754 = vpop.xlane.xlu0 %753
    %771 = vrot.lane.b32.xlu0 %v92, 120
    %v772 = vpop.permute.xlu0 %771
    %773 = vrot.lane.b32.xlu0 %v93, 120
    %v774 = vpop.permute.xlu0 %773
    %775 = vrot.lane.b32.xlu0 %v94, 120
    %v776 = vpop.permute.xlu0 %775
    %777 = vrot.lane.b32.xlu0 %v95, 120
    %v778 = vpop.permute.xlu0 %777
    %779 = vrot.lane.b32.xlu0 %v96, 120
    %v780 = vpop.permute.xlu0 %779
    %781 = vrot.lane.b32.xlu0 %v97, 120
    %v782 = vpop.permute.xlu0 %781
    %783 = vrot.lane.b32.xlu0 %v98, 120
    %v784 = vpop.permute.xlu0 %783
    %785 = vrot.lane.b32.xlu0 %v99, 120
    %v786 = vpop.permute.xlu0 %785
    %787 = vrot.lane.b32.xlu0 %v100, 120
    %v788 = vpop.permute.xlu0 %787
    %789 = vrot.lane.b32.xlu0 %v101, 120
    %v790 = vpop.permute.xlu0 %789
    %791 = vrot.lane.b32.xlu0 %v102, 120
    %v792 = vpop.permute.xlu0 %791
    %793 = vrot.lane.b32.xlu0 %v103, 120
    %v794 = vpop.permute.xlu0 %793
    %795 = vrot.lane.b32.xlu0 %v104, 120
    %v796 = vpop.permute.xlu0 %795
    %797 = vrot.lane.b32.xlu0 %v105, 120
    %v798 = vpop.permute.xlu0 %797
    %799 = vrot.lane.b32.xlu0 %v106, 120
    %v800 = vpop.permute.xlu0 %799
    %801 = vrot.lane.b32.xlu0 %v107, 120
    %v802 = vpop.permute.xlu0 %801
    %819 = vmatpush.msra.mxu0 %v802
    %820 = vmatpush.msra.mxu0 %v800
    %821 = vmatpush.msra.mxu0 %v798
    %822 = vmatpush.msra.mxu0 %v796
    %823 = vmatpush.msra.mxu0 %v794
    %824 = vmatpush.msra.mxu0 %v792
    %825 = vmatpush.msra.mxu0 %v790
    %826 = vmatpush.msra.mxu0 %v788
    %827 = vmatpush.msra.mxu0 %v786
    %828 = vmatpush.msra.mxu0 %v784
    %829 = vmatpush.msra.mxu0 %v782
    %830 = vmatpush.msra.mxu0 %v780
    %831 = vmatpush.msra.mxu0 %v778
    %832 = vmatpush.msra.mxu0 %v776
    %833 = vmatpush.msra.mxu0 %v774
    %834 = vmatpush.msra.mxu0 %v772
    %835 = vmatmul.f32.gmra.mxu0 %v692
    %v836 = vpop.f32.mrf.mxu0
    %v837 = vadd.f32 0.0, %v836
    %838 = vmatmul.f32.gmra.mxu0 %v694
    %v839 = vpop.f32.mrf.mxu0
    %v840 = vadd.f32 0.0, %v839
    %841 = vmatmul.f32.gmra.mxu0 %v696
    %v842 = vpop.f32.mrf.mxu0
    %v843 = vadd.f32 0.0, %v842
    %844 = vmatmul.f32.gmra.mxu0 %v698
    %v845 = vpop.f32.mrf.mxu0
    %v846 = vadd.f32 0.0, %v845
    %847 = vmatmul.f32.gmra.mxu0 %v700
    %v848 = vpop.f32.mrf.mxu0
    %v849 = vadd.f32 0.0, %v848
    %850 = vmatmul.f32.gmra.mxu0 %v702
    %v851 = vpop.f32.mrf.mxu0
    %v852 = vadd.f32 0.0, %v851
    %853 = vmatmul.f32.gmra.mxu0 %v704
    %v854 = vpop.f32.mrf.mxu0
    %v855 = vadd.f32 0.0, %v854
    %856 = vmatmul.f32.gmra.mxu0 %v706
    %v857 = vpop.f32.mrf.mxu0
    %v858 = vadd.f32 0.0, %v857
    %859 = vmatmul.f32.gmra.mxu0 %v708
    %v860 = vpop.f32.mrf.mxu0
    %v861 = vadd.f32 0.0, %v860
    %862 = vmatmul.f32.gmra.mxu0 %v710
    %v863 = vpop.f32.mrf.mxu0
    %v864 = vadd.f32 0.0, %v863
    %865 = vmatmul.f32.gmra.mxu0 %v712
    %v866 = vpop.f32.mrf.mxu0
    %v867 = vadd.f32 0.0, %v866
    %868 = vmatmul.f32.gmra.mxu0 %v714
    %v869 = vpop.f32.mrf.mxu0
    %v870 = vadd.f32 0.0, %v869
    %871 = vmatmul.f32.gmra.mxu0 %v716
    %v872 = vpop.f32.mrf.mxu0
    %v873 = vadd.f32 0.0, %v872
    %874 = vmatmul.f32.gmra.mxu0 %v718
    %v875 = vpop.f32.mrf.mxu0
    %v876 = vadd.f32 0.0, %v875
    %877 = vmatmul.f32.gmra.mxu0 %v720
    %v878 = vpop.f32.mrf.mxu0
    %v879 = vadd.f32 0.0, %v878
    %880 = vmatmul.f32.gmra.mxu0 %v722
    %v881 = vpop.f32.mrf.mxu0
    %v882 = vadd.f32 0.0, %v881
    %883 = vdwg.mxu0
    %884 = vset.pattern.permute.xlu0 2
    %885 = vperm.xlu0 %884, %v75
    %v886 = vpop.permute.xlu0 %885
    %888 = vset.pattern.permute.xlu0 2
    %889 = vperm.xlu0 %888, %v76
    %v890 = vpop.permute.xlu0 %889
    %892 = vset.pattern.permute.xlu0 2
    %893 = vperm.xlu0 %892, %v77
    %v894 = vpop.permute.xlu0 %893
    %896 = vset.pattern.permute.xlu0 2
    %897 = vperm.xlu0 %896, %v78
    %v898 = vpop.permute.xlu0 %897
    %900 = vset.pattern.permute.xlu0 2
    %901 = vperm.xlu0 %900, %v79
    %v902 = vpop.permute.xlu0 %901
    %904 = vset.pattern.permute.xlu0 2
    %905 = vperm.xlu0 %904, %v80
    %v906 = vpop.permute.xlu0 %905
    %908 = vset.pattern.permute.xlu0 2
    %909 = vperm.xlu0 %908, %v81
    %v910 = vpop.permute.xlu0 %909
    %912 = vset.pattern.permute.xlu0 2
    %913 = vperm.xlu0 %912, %v82
    %v914 = vpop.permute.xlu0 %913
    %916 = vset.pattern.permute.xlu0 2
    %917 = vperm.xlu0 %916, %v83
    %v918 = vpop.permute.xlu0 %917
    %920 = vset.pattern.permute.xlu0 2
    %921 = vperm.xlu0 %920, %v84
    %v922 = vpop.permute.xlu0 %921
    %924 = vset.pattern.permute.xlu0 2
    %925 = vperm.xlu0 %924, %v85
    %v926 = vpop.permute.xlu0 %925
    %928 = vset.pattern.permute.xlu0 2
    %929 = vperm.xlu0 %928, %v86
    %v930 = vpop.permute.xlu0 %929
    %932 = vset.pattern.permute.xlu0 2
    %933 = vperm.xlu0 %932, %v87
    %v934 = vpop.permute.xlu0 %933
    %936 = vset.pattern.permute.xlu0 2
    %937 = vperm.xlu0 %936, %v88
    %v938 = vpop.permute.xlu0 %937
    %940 = vset.pattern.permute.xlu0 2
    %941 = vperm.xlu0 %940, %v89
    %v942 = vpop.permute.xlu0 %941
    %944 = vset.pattern.permute.xlu0 2
    %945 = vperm.xlu0 %944, %v90
    %v946 = vpop.permute.xlu0 %945
    %v948 = vperm.slane %v91, 2
    %v949 = vadd.f32 %v886, %v948
    %v950 = vadd.f32 %v890, %v948
    %v951 = vadd.f32 %v894, %v948
    %v952 = vadd.f32 %v898, %v948
    %v953 = vadd.f32 %v902, %v948
    %v954 = vadd.f32 %v906, %v948
    %v955 = vadd.f32 %v910, %v948
    %v956 = vadd.f32 %v914, %v948
    %v957 = vadd.f32 %v918, %v948
    %v958 = vadd.f32 %v922, %v948
    %v959 = vadd.f32 %v926, %v948
    %v960 = vadd.f32 %v930, %v948
    %v961 = vadd.f32 %v934, %v948
    %v962 = vadd.f32 %v938, %v948
    %v963 = vadd.f32 %v942, %v948
    %v964 = vadd.f32 %v946, %v948
    %vm965 = vcmp.gt.f32.partialorder %v949, 0.0
    %vm966 = vcmp.gt.f32.partialorder %v950, 0.0
    %vm967 = vcmp.gt.f32.partialorder %v951, 0.0
    %vm968 = vcmp.gt.f32.partialorder %v952, 0.0
    %vm969 = vcmp.gt.f32.partialorder %v953, 0.0
    %vm970 = vcmp.gt.f32.partialorder %v954, 0.0
    %vm971 = vcmp.gt.f32.partialorder %v955, 0.0
    %vm972 = vcmp.gt.f32.partialorder %v956, 0.0
    %vm973 = vcmp.gt.f32.partialorder %v957, 0.0
    %vm974 = vcmp.gt.f32.partialorder %v958, 0.0
    %vm975 = vcmp.gt.f32.partialorder %v959, 0.0
    %vm976 = vcmp.gt.f32.partialorder %v960, 0.0
    %vm977 = vcmp.gt.f32.partialorder %v961, 0.0
    %vm978 = vcmp.gt.f32.partialorder %v962, 0.0
    %vm979 = vcmp.gt.f32.partialorder %v963, 0.0
    %vm980 = vcmp.gt.f32.partialorder %v964, 0.0
    %v981 = vsub.f32 0.0, %v949
    %v982 = vsub.f32 0.0, %v950
    %v983 = vsub.f32 0.0, %v951
    %v984 = vsub.f32 0.0, %v952
    %v985 = vsub.f32 0.0, %v953
    %v986 = vsub.f32 0.0, %v954
    %v987 = vsub.f32 0.0, %v955
    %v988 = vsub.f32 0.0, %v956
    %v989 = vsub.f32 0.0, %v957
    %v990 = vsub.f32 0.0, %v958
    %v991 = vsub.f32 0.0, %v959
    %v992 = vsub.f32 0.0, %v960
    %v993 = vsub.f32 0.0, %v961
    %v994 = vsub.f32 0.0, %v962
    %v995 = vsub.f32 0.0, %v963
    %v996 = vsub.f32 0.0, %v964
    %v997 = vmul.f32 %v949, -0.2
    %v998 = vmul.f32 %v950, -0.2
    %v999 = vmul.f32 %v951, -0.2
    %v1000 = vmul.f32 %v952, -0.2
    %v1001 = vmul.f32 %v953, -0.2
    %v1002 = vmul.f32 %v954, -0.2
    %v1003 = vmul.f32 %v955, -0.2
    %v1004 = vmul.f32 %v956, -0.2
    %v1005 = vmul.f32 %v957, -0.2
    %v1006 = vmul.f32 %v958, -0.2
    %v1007 = vmul.f32 %v959, -0.2
    %v1008 = vmul.f32 %v960, -0.2
    %v1009 = vmul.f32 %v961, -0.2
    %v1010 = vmul.f32 %v962, -0.2
    %v1011 = vmul.f32 %v963, -0.2
    %v1012 = vmul.f32 %v964, -0.2
    %v1013 = vsel %vm965, %v981, %v997
    %v1014 = vsel %vm966, %v982, %v998
    %v1015 = vsel %vm967, %v983, %v999
    %v1016 = vsel %vm968, %v984, %v1000
    %v1017 = vsel %vm969, %v985, %v1001
    %v1018 = vsel %vm970, %v986, %v1002
    %v1019 = vsel %vm971, %v987, %v1003
    %v1020 = vsel %vm972, %v988, %v1004
    %v1021 = vsel %vm973, %v989, %v1005
    %v1022 = vsel %vm974, %v990, %v1006
    %v1023 = vsel %vm975, %v991, %v1007
    %v1024 = vsel %vm976, %v992, %v1008
    %v1025 = vsel %vm977, %v993, %v1009
    %v1026 = vsel %vm978, %v994, %v1010
    %v1027 = vsel %vm979, %v995, %v1011
    %v1028 = vsel %vm980, %v996, %v1012
    %v1029 = vsel %vm369, %v1013, -1e+30
    %v1030 = vsel %vm370, %v1014, -1e+30
    %v1031 = vsel %vm371, %v1015, -1e+30
    %v1032 = vsel %vm372, %v1016, -1e+30
    %v1033 = vsel %vm373, %v1017, -1e+30
    %v1034 = vsel %vm374, %v1018, -1e+30
    %v1035 = vsel %vm375, %v1019, -1e+30
    %v1036 = vsel %vm376, %v1020, -1e+30
    %v1037 = vsel %vm377, %v1021, -1e+30
    %v1038 = vsel %vm378, %v1022, -1e+30
    %v1039 = vsel %vm379, %v1023, -1e+30
    %v1040 = vsel %vm380, %v1024, -1e+30
    %v1041 = vsel %vm381, %v1025, -1e+30
    %v1042 = vsel %vm382, %v1026, -1e+30
    %v1043 = vsel %vm383, %v1027, -1e+30
    %v1044 = vsel %vm384, %v1028, -1e+30
    %v1045 = vmul.f32 %v1029, 1.442695
    %v1046 = vpow.pop %v1045
    %v1047 = vmul.f32 %v1030, 1.442695
    %v1048 = vpow.pop %v1047
    %v1049 = vmul.f32 %v1031, 1.442695
    %v1050 = vpow.pop %v1049
    %v1051 = vmul.f32 %v1032, 1.442695
    %v1052 = vpow.pop %v1051
    %v1053 = vmul.f32 %v1033, 1.442695
    %v1054 = vpow.pop %v1053
    %v1055 = vmul.f32 %v1034, 1.442695
    %v1056 = vpow.pop %v1055
    %v1057 = vmul.f32 %v1035, 1.442695
    %v1058 = vpow.pop %v1057
    %v1059 = vmul.f32 %v1036, 1.442695
    %v1060 = vpow.pop %v1059
    %v1061 = vmul.f32 %v1037, 1.442695
    %v1062 = vpow.pop %v1061
    %v1063 = vmul.f32 %v1038, 1.442695
    %v1064 = vpow.pop %v1063
    %v1065 = vmul.f32 %v1039, 1.442695
    %v1066 = vpow.pop %v1065
    %v1067 = vmul.f32 %v1040, 1.442695
    %v1068 = vpow.pop %v1067
    %v1069 = vmul.f32 %v1041, 1.442695
    %v1070 = vpow.pop %v1069
    %v1071 = vmul.f32 %v1042, 1.442695
    %v1072 = vpow.pop %v1071
    %v1073 = vmul.f32 %v1043, 1.442695
    %v1074 = vpow.pop %v1073
    %v1075 = vmul.f32 %v1044, 1.442695
    %v1076 = vpow.pop %v1075
    %1077 = vadd.xlane.f32.xlu0 %v1046
    %v1078 = vpop.xlane.xlu0 %1077
    %1079 = vadd.xlane.f32.xlu0 %v1048
    %v1080 = vpop.xlane.xlu0 %1079
    %1081 = vadd.xlane.f32.xlu0 %v1050
    %v1082 = vpop.xlane.xlu0 %1081
    %1083 = vadd.xlane.f32.xlu0 %v1052
    %v1084 = vpop.xlane.xlu0 %1083
    %1085 = vadd.xlane.f32.xlu0 %v1054
    %v1086 = vpop.xlane.xlu0 %1085
    %1087 = vadd.xlane.f32.xlu0 %v1056
    %v1088 = vpop.xlane.xlu0 %1087
    %1089 = vadd.xlane.f32.xlu0 %v1058
    %v1090 = vpop.xlane.xlu0 %1089
    %1091 = vadd.xlane.f32.xlu0 %v1060
    %v1092 = vpop.xlane.xlu0 %1091
    %1093 = vadd.xlane.f32.xlu0 %v1062
    %v1094 = vpop.xlane.xlu0 %1093
    %1095 = vadd.xlane.f32.xlu0 %v1064
    %v1096 = vpop.xlane.xlu0 %1095
    %1097 = vadd.xlane.f32.xlu0 %v1066
    %v1098 = vpop.xlane.xlu0 %1097
    %1099 = vadd.xlane.f32.xlu0 %v1068
    %v1100 = vpop.xlane.xlu0 %1099
    %1101 = vadd.xlane.f32.xlu0 %v1070
    %v1102 = vpop.xlane.xlu0 %1101
    %1103 = vadd.xlane.f32.xlu0 %v1072
    %v1104 = vpop.xlane.xlu0 %1103
    %1105 = vadd.xlane.f32.xlu0 %v1074
    %v1106 = vpop.xlane.xlu0 %1105
    %1107 = vadd.xlane.f32.xlu0 %v1076
    %v1108 = vpop.xlane.xlu0 %1107
    %1109 = vrot.lane.b32.xlu0 %v92, 112
    %v1110 = vpop.permute.xlu0 %1109
    %1111 = vrot.lane.b32.xlu0 %v93, 112
    %v1112 = vpop.permute.xlu0 %1111
    %1113 = vrot.lane.b32.xlu0 %v94, 112
    %v1114 = vpop.permute.xlu0 %1113
    %1115 = vrot.lane.b32.xlu0 %v95, 112
    %v1116 = vpop.permute.xlu0 %1115
    %1117 = vrot.lane.b32.xlu0 %v96, 112
    %v1118 = vpop.permute.xlu0 %1117
    %1119 = vrot.lane.b32.xlu0 %v97, 112
    %v1120 = vpop.permute.xlu0 %1119
    %1121 = vrot.lane.b32.xlu0 %v98, 112
    %v1122 = vpop.permute.xlu0 %1121
    %1123 = vrot.lane.b32.xlu0 %v99, 112
    %v1124 = vpop.permute.xlu0 %1123
    %1125 = vrot.lane.b32.xlu0 %v100, 112
    %v1126 = vpop.permute.xlu0 %1125
    %1127 = vrot.lane.b32.xlu0 %v101, 112
    %v1128 = vpop.permute.xlu0 %1127
    %1129 = vrot.lane.b32.xlu0 %v102, 112
    %v1130 = vpop.permute.xlu0 %1129
    %1131 = vrot.lane.b32.xlu0 %v103, 112
    %v1132 = vpop.permute.xlu0 %1131
    %1133 = vrot.lane.b32.xlu0 %v104, 112
    %v1134 = vpop.permute.xlu0 %1133
    %1135 = vrot.lane.b32.xlu0 %v105, 112
    %v1136 = vpop.permute.xlu0 %1135
    %1137 = vrot.lane.b32.xlu0 %v106, 112
    %v1138 = vpop.permute.xlu0 %1137
    %1139 = vrot.lane.b32.xlu0 %v107, 112
    %v1140 = vpop.permute.xlu0 %1139
    %1157 = vmatpush.msra.mxu0 %v1140
    %1158 = vmatpush.msra.mxu0 %v1138
    %1159 = vmatpush.msra.mxu0 %v1136
    %1160 = vmatpush.msra.mxu0 %v1134
    %1161 = vmatpush.msra.mxu0 %v1132
    %1162 = vmatpush.msra.mxu0 %v1130
    %1163 = vmatpush.msra.mxu0 %v1128
    %1164 = vmatpush.msra.mxu0 %v1126
    %1165 = vmatpush.msra.mxu0 %v1124
    %1166 = vmatpush.msra.mxu0 %v1122
    %1167 = vmatpush.msra.mxu0 %v1120
    %1168 = vmatpush.msra.mxu0 %v1118
    %1169 = vmatpush.msra.mxu0 %v1116
    %1170 = vmatpush.msra.mxu0 %v1114
    %1171 = vmatpush.msra.mxu0 %v1112
    %1172 = vmatpush.msra.mxu0 %v1110
    %1173 = vmatmul.f32.gmra.mxu0 %v1046
    %v1174 = vpop.f32.mrf.mxu0
    %v1175 = vadd.f32 0.0, %v1174
    %1176 = vmatmul.f32.gmra.mxu0 %v1048
    %v1177 = vpop.f32.mrf.mxu0
    %v1178 = vadd.f32 0.0, %v1177
    %1179 = vmatmul.f32.gmra.mxu0 %v1050
    %v1180 = vpop.f32.mrf.mxu0
    %v1181 = vadd.f32 0.0, %v1180
    %1182 = vmatmul.f32.gmra.mxu0 %v1052
    %v1183 = vpop.f32.mrf.mxu0
    %v1184 = vadd.f32 0.0, %v1183
    %1185 = vmatmul.f32.gmra.mxu0 %v1054
    %v1186 = vpop.f32.mrf.mxu0
    %v1187 = vadd.f32 0.0, %v1186
    %1188 = vmatmul.f32.gmra.mxu0 %v1056
    %v1189 = vpop.f32.mrf.mxu0
    %v1190 = vadd.f32 0.0, %v1189
    %1191 = vmatmul.f32.gmra.mxu0 %v1058
    %v1192 = vpop.f32.mrf.mxu0
    %v1193 = vadd.f32 0.0, %v1192
    %1194 = vmatmul.f32.gmra.mxu0 %v1060
    %v1195 = vpop.f32.mrf.mxu0
    %v1196 = vadd.f32 0.0, %v1195
    %1197 = vmatmul.f32.gmra.mxu0 %v1062
    %v1198 = vpop.f32.mrf.mxu0
    %v1199 = vadd.f32 0.0, %v1198
    %1200 = vmatmul.f32.gmra.mxu0 %v1064
    %v1201 = vpop.f32.mrf.mxu0
    %v1202 = vadd.f32 0.0, %v1201
    %1203 = vmatmul.f32.gmra.mxu0 %v1066
    %v1204 = vpop.f32.mrf.mxu0
    %v1205 = vadd.f32 0.0, %v1204
    %1206 = vmatmul.f32.gmra.mxu0 %v1068
    %v1207 = vpop.f32.mrf.mxu0
    %v1208 = vadd.f32 0.0, %v1207
    %1209 = vmatmul.f32.gmra.mxu0 %v1070
    %v1210 = vpop.f32.mrf.mxu0
    %v1211 = vadd.f32 0.0, %v1210
    %1212 = vmatmul.f32.gmra.mxu0 %v1072
    %v1213 = vpop.f32.mrf.mxu0
    %v1214 = vadd.f32 0.0, %v1213
    %1215 = vmatmul.f32.gmra.mxu0 %v1074
    %v1216 = vpop.f32.mrf.mxu0
    %v1217 = vadd.f32 0.0, %v1216
    %1218 = vmatmul.f32.gmra.mxu0 %v1076
    %v1219 = vpop.f32.mrf.mxu0
    %v1220 = vadd.f32 0.0, %v1219
    %1221 = vdwg.mxu0
    %1222 = vset.pattern.permute.xlu0 3
    %1223 = vperm.xlu0 %1222, %v75
    %v1224 = vpop.permute.xlu0 %1223
    %1226 = vset.pattern.permute.xlu0 3
    %1227 = vperm.xlu0 %1226, %v76
    %v1228 = vpop.permute.xlu0 %1227
    %1230 = vset.pattern.permute.xlu0 3
    %1231 = vperm.xlu0 %1230, %v77
    %v1232 = vpop.permute.xlu0 %1231
    %1234 = vset.pattern.permute.xlu0 3
    %1235 = vperm.xlu0 %1234, %v78
    %v1236 = vpop.permute.xlu0 %1235
    %1238 = vset.pattern.permute.xlu0 3
    %1239 = vperm.xlu0 %1238, %v79
    %v1240 = vpop.permute.xlu0 %1239
    %1242 = vset.pattern.permute.xlu0 3
    %1243 = vperm.xlu0 %1242, %v80
    %v1244 = vpop.permute.xlu0 %1243
    %1246 = vset.pattern.permute.xlu0 3
    %1247 = vperm.xlu0 %1246, %v81
    %v1248 = vpop.permute.xlu0 %1247
    %1250 = vset.pattern.permute.xlu0 3
    %1251 = vperm.xlu0 %1250, %v82
    %v1252 = vpop.permute.xlu0 %1251
    %1254 = vset.pattern.permute.xlu0 3
    %1255 = vperm.xlu0 %1254, %v83
    %v1256 = vpop.permute.xlu0 %1255
    %1258 = vset.pattern.permute.xlu0 3
    %1259 = vperm.xlu0 %1258, %v84
    %v1260 = vpop.permute.xlu0 %1259
    %1262 = vset.pattern.permute.xlu0 3
    %1263 = vperm.xlu0 %1262, %v85
    %v1264 = vpop.permute.xlu0 %1263
    %1266 = vset.pattern.permute.xlu0 3
    %1267 = vperm.xlu0 %1266, %v86
    %v1268 = vpop.permute.xlu0 %1267
    %1270 = vset.pattern.permute.xlu0 3
    %1271 = vperm.xlu0 %1270, %v87
    %v1272 = vpop.permute.xlu0 %1271
    %1274 = vset.pattern.permute.xlu0 3
    %1275 = vperm.xlu0 %1274, %v88
    %v1276 = vpop.permute.xlu0 %1275
    %1278 = vset.pattern.permute.xlu0 3
    %1279 = vperm.xlu0 %1278, %v89
    %v1280 = vpop.permute.xlu0 %1279
    %1282 = vset.pattern.permute.xlu0 3
    %1283 = vperm.xlu0 %1282, %v90
    %v1284 = vpop.permute.xlu0 %1283
    %v1286 = vperm.slane %v91, 3
    %v1287 = vadd.f32 %v1224, %v1286
    %v1288 = vadd.f32 %v1228, %v1286
    %v1289 = vadd.f32 %v1232, %v1286
    %v1290 = vadd.f32 %v1236, %v1286
    %v1291 = vadd.f32 %v1240, %v1286
    %v1292 = vadd.f32 %v1244, %v1286
    %v1293 = vadd.f32 %v1248, %v1286
    %v1294 = vadd.f32 %v1252, %v1286
    %v1295 = vadd.f32 %v1256, %v1286
    %v1296 = vadd.f32 %v1260, %v1286
    %v1297 = vadd.f32 %v1264, %v1286
    %v1298 = vadd.f32 %v1268, %v1286
    %v1299 = vadd.f32 %v1272, %v1286
    %v1300 = vadd.f32 %v1276, %v1286
    %v1301 = vadd.f32 %v1280, %v1286
    %v1302 = vadd.f32 %v1284, %v1286
    %vm1303 = vcmp.gt.f32.partialorder %v1287, 0.0
    %vm1304 = vcmp.gt.f32.partialorder %v1288, 0.0
    %vm1305 = vcmp.gt.f32.partialorder %v1289, 0.0
    %vm1306 = vcmp.gt.f32.partialorder %v1290, 0.0
    %vm1307 = vcmp.gt.f32.partialorder %v1291, 0.0
    %vm1308 = vcmp.gt.f32.partialorder %v1292, 0.0
    %vm1309 = vcmp.gt.f32.partialorder %v1293, 0.0
    %vm1310 = vcmp.gt.f32.partialorder %v1294, 0.0
    %vm1311 = vcmp.gt.f32.partialorder %v1295, 0.0
    %vm1312 = vcmp.gt.f32.partialorder %v1296, 0.0
    %vm1313 = vcmp.gt.f32.partialorder %v1297, 0.0
    %vm1314 = vcmp.gt.f32.partialorder %v1298, 0.0
    %vm1315 = vcmp.gt.f32.partialorder %v1299, 0.0
    %vm1316 = vcmp.gt.f32.partialorder %v1300, 0.0
    %vm1317 = vcmp.gt.f32.partialorder %v1301, 0.0
    %vm1318 = vcmp.gt.f32.partialorder %v1302, 0.0
    %v1319 = vsub.f32 0.0, %v1287
    %v1320 = vsub.f32 0.0, %v1288
    %v1321 = vsub.f32 0.0, %v1289
    %v1322 = vsub.f32 0.0, %v1290
    %v1323 = vsub.f32 0.0, %v1291
    %v1324 = vsub.f32 0.0, %v1292
    %v1325 = vsub.f32 0.0, %v1293
    %v1326 = vsub.f32 0.0, %v1294
    %v1327 = vsub.f32 0.0, %v1295
    %v1328 = vsub.f32 0.0, %v1296
    %v1329 = vsub.f32 0.0, %v1297
    %v1330 = vsub.f32 0.0, %v1298
    %v1331 = vsub.f32 0.0, %v1299
    %v1332 = vsub.f32 0.0, %v1300
    %v1333 = vsub.f32 0.0, %v1301
    %v1334 = vsub.f32 0.0, %v1302
    %v1335 = vmul.f32 %v1287, -0.2
    %v1336 = vmul.f32 %v1288, -0.2
    %v1337 = vmul.f32 %v1289, -0.2
    %v1338 = vmul.f32 %v1290, -0.2
    %v1339 = vmul.f32 %v1291, -0.2
    %v1340 = vmul.f32 %v1292, -0.2
    %v1341 = vmul.f32 %v1293, -0.2
    %v1342 = vmul.f32 %v1294, -0.2
    %v1343 = vmul.f32 %v1295, -0.2
    %v1344 = vmul.f32 %v1296, -0.2
    %v1345 = vmul.f32 %v1297, -0.2
    %v1346 = vmul.f32 %v1298, -0.2
    %v1347 = vmul.f32 %v1299, -0.2
    %v1348 = vmul.f32 %v1300, -0.2
    %v1349 = vmul.f32 %v1301, -0.2
    %v1350 = vmul.f32 %v1302, -0.2
    %v1351 = vsel %vm1303, %v1319, %v1335
    %v1352 = vsel %vm1304, %v1320, %v1336
    %v1353 = vsel %vm1305, %v1321, %v1337
    %v1354 = vsel %vm1306, %v1322, %v1338
    %v1355 = vsel %vm1307, %v1323, %v1339
    %v1356 = vsel %vm1308, %v1324, %v1340
    %v1357 = vsel %vm1309, %v1325, %v1341
    %v1358 = vsel %vm1310, %v1326, %v1342
    %v1359 = vsel %vm1311, %v1327, %v1343
    %v1360 = vsel %vm1312, %v1328, %v1344
    %v1361 = vsel %vm1313, %v1329, %v1345
    %v1362 = vsel %vm1314, %v1330, %v1346
    %v1363 = vsel %vm1315, %v1331, %v1347
    %v1364 = vsel %vm1316, %v1332, %v1348
    %v1365 = vsel %vm1317, %v1333, %v1349
    %v1366 = vsel %vm1318, %v1334, %v1350
    %v1367 = vsel %vm369, %v1351, -1e+30
    %v1368 = vsel %vm370, %v1352, -1e+30
    %v1369 = vsel %vm371, %v1353, -1e+30
    %v1370 = vsel %vm372, %v1354, -1e+30
    %v1371 = vsel %vm373, %v1355, -1e+30
    %v1372 = vsel %vm374, %v1356, -1e+30
    %v1373 = vsel %vm375, %v1357, -1e+30
    %v1374 = vsel %vm376, %v1358, -1e+30
    %v1375 = vsel %vm377, %v1359, -1e+30
    %v1376 = vsel %vm378, %v1360, -1e+30
    %v1377 = vsel %vm379, %v1361, -1e+30
    %v1378 = vsel %vm380, %v1362, -1e+30
    %v1379 = vsel %vm381, %v1363, -1e+30
    %v1380 = vsel %vm382, %v1364, -1e+30
    %v1381 = vsel %vm383, %v1365, -1e+30
    %v1382 = vsel %vm384, %v1366, -1e+30
    %v1383 = vmul.f32 %v1367, 1.442695
    %v1384 = vpow.pop %v1383
    %v1385 = vmul.f32 %v1368, 1.442695
    %v1386 = vpow.pop %v1385
    %v1387 = vmul.f32 %v1369, 1.442695
    %v1388 = vpow.pop %v1387
    %v1389 = vmul.f32 %v1370, 1.442695
    %v1390 = vpow.pop %v1389
    %v1391 = vmul.f32 %v1371, 1.442695
    %v1392 = vpow.pop %v1391
    %v1393 = vmul.f32 %v1372, 1.442695
    %v1394 = vpow.pop %v1393
    %v1395 = vmul.f32 %v1373, 1.442695
    %v1396 = vpow.pop %v1395
    %v1397 = vmul.f32 %v1374, 1.442695
    %v1398 = vpow.pop %v1397
    %v1399 = vmul.f32 %v1375, 1.442695
    %v1400 = vpow.pop %v1399
    %v1401 = vmul.f32 %v1376, 1.442695
    %v1402 = vpow.pop %v1401
    %v1403 = vmul.f32 %v1377, 1.442695
    %v1404 = vpow.pop %v1403
    %v1405 = vmul.f32 %v1378, 1.442695
    %v1406 = vpow.pop %v1405
    %v1407 = vmul.f32 %v1379, 1.442695
    %v1408 = vpow.pop %v1407
    %v1409 = vmul.f32 %v1380, 1.442695
    %v1410 = vpow.pop %v1409
    %v1411 = vmul.f32 %v1381, 1.442695
    %v1412 = vpow.pop %v1411
    %v1413 = vmul.f32 %v1382, 1.442695
    %v1414 = vpow.pop %v1413
    %1415 = vadd.xlane.f32.xlu0 %v1384
    %v1416 = vpop.xlane.xlu0 %1415
    %1417 = vadd.xlane.f32.xlu0 %v1386
    %v1418 = vpop.xlane.xlu0 %1417
    %1419 = vadd.xlane.f32.xlu0 %v1388
    %v1420 = vpop.xlane.xlu0 %1419
    %1421 = vadd.xlane.f32.xlu0 %v1390
    %v1422 = vpop.xlane.xlu0 %1421
    %1423 = vadd.xlane.f32.xlu0 %v1392
    %v1424 = vpop.xlane.xlu0 %1423
    %1425 = vadd.xlane.f32.xlu0 %v1394
    %v1426 = vpop.xlane.xlu0 %1425
    %1427 = vadd.xlane.f32.xlu0 %v1396
    %v1428 = vpop.xlane.xlu0 %1427
    %1429 = vadd.xlane.f32.xlu0 %v1398
    %v1430 = vpop.xlane.xlu0 %1429
    %1431 = vadd.xlane.f32.xlu0 %v1400
    %v1432 = vpop.xlane.xlu0 %1431
    %1433 = vadd.xlane.f32.xlu0 %v1402
    %v1434 = vpop.xlane.xlu0 %1433
    %1435 = vadd.xlane.f32.xlu0 %v1404
    %v1436 = vpop.xlane.xlu0 %1435
    %1437 = vadd.xlane.f32.xlu0 %v1406
    %v1438 = vpop.xlane.xlu0 %1437
    %1439 = vadd.xlane.f32.xlu0 %v1408
    %v1440 = vpop.xlane.xlu0 %1439
    %1441 = vadd.xlane.f32.xlu0 %v1410
    %v1442 = vpop.xlane.xlu0 %1441
    %1443 = vadd.xlane.f32.xlu0 %v1412
    %v1444 = vpop.xlane.xlu0 %1443
    %1445 = vadd.xlane.f32.xlu0 %v1414
    %v1446 = vpop.xlane.xlu0 %1445
    %1447 = vrot.lane.b32.xlu0 %v92, 104
    %v1448 = vpop.permute.xlu0 %1447
    %1449 = vrot.lane.b32.xlu0 %v93, 104
    %v1450 = vpop.permute.xlu0 %1449
    %1451 = vrot.lane.b32.xlu0 %v94, 104
    %v1452 = vpop.permute.xlu0 %1451
    %1453 = vrot.lane.b32.xlu0 %v95, 104
    %v1454 = vpop.permute.xlu0 %1453
    %1455 = vrot.lane.b32.xlu0 %v96, 104
    %v1456 = vpop.permute.xlu0 %1455
    %1457 = vrot.lane.b32.xlu0 %v97, 104
    %v1458 = vpop.permute.xlu0 %1457
    %1459 = vrot.lane.b32.xlu0 %v98, 104
    %v1460 = vpop.permute.xlu0 %1459
    %1461 = vrot.lane.b32.xlu0 %v99, 104
    %v1462 = vpop.permute.xlu0 %1461
    %1463 = vrot.lane.b32.xlu0 %v100, 104
    %v1464 = vpop.permute.xlu0 %1463
    %1465 = vrot.lane.b32.xlu0 %v101, 104
    %v1466 = vpop.permute.xlu0 %1465
    %1467 = vrot.lane.b32.xlu0 %v102, 104
    %v1468 = vpop.permute.xlu0 %1467
    %1469 = vrot.lane.b32.xlu0 %v103, 104
    %v1470 = vpop.permute.xlu0 %1469
    %1471 = vrot.lane.b32.xlu0 %v104, 104
    %v1472 = vpop.permute.xlu0 %1471
    %1473 = vrot.lane.b32.xlu0 %v105, 104
    %v1474 = vpop.permute.xlu0 %1473
    %1475 = vrot.lane.b32.xlu0 %v106, 104
    %v1476 = vpop.permute.xlu0 %1475
    %1477 = vrot.lane.b32.xlu0 %v107, 104
    %v1478 = vpop.permute.xlu0 %1477
    %1495 = vmatpush.msra.mxu0 %v1478
    %1496 = vmatpush.msra.mxu0 %v1476
    %1497 = vmatpush.msra.mxu0 %v1474
    %1498 = vmatpush.msra.mxu0 %v1472
    %1499 = vmatpush.msra.mxu0 %v1470
    %1500 = vmatpush.msra.mxu0 %v1468
    %1501 = vmatpush.msra.mxu0 %v1466
    %1502 = vmatpush.msra.mxu0 %v1464
    %1503 = vmatpush.msra.mxu0 %v1462
    %1504 = vmatpush.msra.mxu0 %v1460
    %1505 = vmatpush.msra.mxu0 %v1458
    %1506 = vmatpush.msra.mxu0 %v1456
    %1507 = vmatpush.msra.mxu0 %v1454
    %1508 = vmatpush.msra.mxu0 %v1452
    %1509 = vmatpush.msra.mxu0 %v1450
    %1510 = vmatpush.msra.mxu0 %v1448
    %1511 = vmatmul.f32.gmra.mxu0 %v1384
    %v1512 = vpop.f32.mrf.mxu0
    %v1513 = vadd.f32 0.0, %v1512
    %1514 = vmatmul.f32.gmra.mxu0 %v1386
    %v1515 = vpop.f32.mrf.mxu0
    %v1516 = vadd.f32 0.0, %v1515
    %1517 = vmatmul.f32.gmra.mxu0 %v1388
    %v1518 = vpop.f32.mrf.mxu0
    %v1519 = vadd.f32 0.0, %v1518
    %1520 = vmatmul.f32.gmra.mxu0 %v1390
    %v1521 = vpop.f32.mrf.mxu0
    %v1522 = vadd.f32 0.0, %v1521
    %1523 = vmatmul.f32.gmra.mxu0 %v1392
    %v1524 = vpop.f32.mrf.mxu0
    %v1525 = vadd.f32 0.0, %v1524
    %1526 = vmatmul.f32.gmra.mxu0 %v1394
    %v1527 = vpop.f32.mrf.mxu0
    %v1528 = vadd.f32 0.0, %v1527
    %1529 = vmatmul.f32.gmra.mxu0 %v1396
    %v1530 = vpop.f32.mrf.mxu0
    %v1531 = vadd.f32 0.0, %v1530
    %1532 = vmatmul.f32.gmra.mxu0 %v1398
    %v1533 = vpop.f32.mrf.mxu0
    %v1534 = vadd.f32 0.0, %v1533
    %1535 = vmatmul.f32.gmra.mxu0 %v1400
    %v1536 = vpop.f32.mrf.mxu0
    %v1537 = vadd.f32 0.0, %v1536
    %1538 = vmatmul.f32.gmra.mxu0 %v1402
    %v1539 = vpop.f32.mrf.mxu0
    %v1540 = vadd.f32 0.0, %v1539
    %1541 = vmatmul.f32.gmra.mxu0 %v1404
    %v1542 = vpop.f32.mrf.mxu0
    %v1543 = vadd.f32 0.0, %v1542
    %1544 = vmatmul.f32.gmra.mxu0 %v1406
    %v1545 = vpop.f32.mrf.mxu0
    %v1546 = vadd.f32 0.0, %v1545
    %1547 = vmatmul.f32.gmra.mxu0 %v1408
    %v1548 = vpop.f32.mrf.mxu0
    %v1549 = vadd.f32 0.0, %v1548
    %1550 = vmatmul.f32.gmra.mxu0 %v1410
    %v1551 = vpop.f32.mrf.mxu0
    %v1552 = vadd.f32 0.0, %v1551
    %1553 = vmatmul.f32.gmra.mxu0 %v1412
    %v1554 = vpop.f32.mrf.mxu0
    %v1555 = vadd.f32 0.0, %v1554
    %1556 = vmatmul.f32.gmra.mxu0 %v1414
    %v1557 = vpop.f32.mrf.mxu0
    %v1558 = vadd.f32 0.0, %v1557
    %1559 = vdwg.mxu0
    %v1560 = vld [vmem:[#allocation2] sm:$0xff]
    %v1561 = vld [vmem:[#allocation2 + $0x8] sm:$0xff]
    %v1562 = vld [vmem:[#allocation2 + $0x10] sm:$0xff]
    %v1563 = vld [vmem:[#allocation2 + $0x18] sm:$0xff]
    %v1564 = vld [vmem:[#allocation2 + $0x20] sm:$0xff]
    %v1565 = vld [vmem:[#allocation2 + $0x28] sm:$0xff]
    %v1566 = vld [vmem:[#allocation2 + $0x30] sm:$0xff]
    %v1567 = vld [vmem:[#allocation2 + $0x38] sm:$0xff]
    %v1568 = vld [vmem:[#allocation2 + $0x40] sm:$0xff]
    %v1569 = vld [vmem:[#allocation2 + $0x48] sm:$0xff]
    %v1570 = vld [vmem:[#allocation2 + $0x50] sm:$0xff]
    %v1571 = vld [vmem:[#allocation2 + $0x58] sm:$0xff]
    %v1572 = vld [vmem:[#allocation2 + $0x60] sm:$0xff]
    %v1573 = vld [vmem:[#allocation2 + $0x68] sm:$0xff]
    %v1574 = vld [vmem:[#allocation2 + $0x70] sm:$0xff]
    %v1575 = vld [vmem:[#allocation2 + $0x78] sm:$0xff]
    %vm1576 = vcmask 7168
    %v1577 = vsel %vm1576, %v434, %v724
    %v1578 = vsel %vm1576, %v436, %v726
    %v1579 = vsel %vm1576, %v438, %v728
    %v1580 = vsel %vm1576, %v440, %v730
    %v1581 = vsel %vm1576, %v442, %v732
    %v1582 = vsel %vm1576, %v444, %v734
    %v1583 = vsel %vm1576, %v446, %v736
    %v1584 = vsel %vm1576, %v448, %v738
    %v1585 = vsel %vm1576, %v450, %v740
    %v1586 = vsel %vm1576, %v452, %v742
    %v1587 = vsel %vm1576, %v454, %v744
    %v1588 = vsel %vm1576, %v456, %v746
    %v1589 = vsel %vm1576, %v458, %v748
    %v1590 = vsel %vm1576, %v460, %v750
    %v1591 = vsel %vm1576, %v462, %v752
    %v1592 = vsel %vm1576, %v464, %v754
    %vm1593 = vcmask 15360
    %v1594 = vsel %vm1593, %v1577, %v1078
    %v1595 = vsel %vm1593, %v1578, %v1080
    %v1596 = vsel %vm1593, %v1579, %v1082
    %v1597 = vsel %vm1593, %v1580, %v1084
    %v1598 = vsel %vm1593, %v1581, %v1086
    %v1599 = vsel %vm1593, %v1582, %v1088
    %v1600 = vsel %vm1593, %v1583, %v1090
    %v1601 = vsel %vm1593, %v1584, %v1092
    %v1602 = vsel %vm1593, %v1585, %v1094
    %v1603 = vsel %vm1593, %v1586, %v1096
    %v1604 = vsel %vm1593, %v1587, %v1098
    %v1605 = vsel %vm1593, %v1588, %v1100
    %v1606 = vsel %vm1593, %v1589, %v1102
    %v1607 = vsel %vm1593, %v1590, %v1104
    %v1608 = vsel %vm1593, %v1591, %v1106
    %v1609 = vsel %vm1593, %v1592, %v1108
    %vm1610 = vcmask 23552
    %v1611 = vsel %vm1610, %v1594, %v1416
    %v1612 = vsel %vm1610, %v1595, %v1418
    %v1613 = vsel %vm1610, %v1596, %v1420
    %v1614 = vsel %vm1610, %v1597, %v1422
    %v1615 = vsel %vm1610, %v1598, %v1424
    %v1616 = vsel %vm1610, %v1599, %v1426
    %v1617 = vsel %vm1610, %v1600, %v1428
    %v1618 = vsel %vm1610, %v1601, %v1430
    %v1619 = vsel %vm1610, %v1602, %v1432
    %v1620 = vsel %vm1610, %v1603, %v1434
    %v1621 = vsel %vm1610, %v1604, %v1436
    %v1622 = vsel %vm1610, %v1605, %v1438
    %v1623 = vsel %vm1610, %v1606, %v1440
    %v1624 = vsel %vm1610, %v1607, %v1442
    %v1625 = vsel %vm1610, %v1608, %v1444
    %v1626 = vsel %vm1610, %v1609, %v1446
    %v1627 = vadd.f32 %v1560, %v1611
    %v1628 = vadd.f32 %v1561, %v1612
    %v1629 = vadd.f32 %v1562, %v1613
    %v1630 = vadd.f32 %v1563, %v1614
    %v1631 = vadd.f32 %v1564, %v1615
    %v1632 = vadd.f32 %v1565, %v1616
    %v1633 = vadd.f32 %v1566, %v1617
    %v1634 = vadd.f32 %v1567, %v1618
    %v1635 = vadd.f32 %v1568, %v1619
    %v1636 = vadd.f32 %v1569, %v1620
    %v1637 = vadd.f32 %v1570, %v1621
    %v1638 = vadd.f32 %v1571, %v1622
    %v1639 = vadd.f32 %v1572, %v1623
    %v1640 = vadd.f32 %v1573, %v1624
    %v1641 = vadd.f32 %v1574, %v1625
    %v1642 = vadd.f32 %v1575, %v1626
    %vm1643 = vcmask 31744
    %1644 = vst.msk [vmem:[#allocation2] sm:$0xff] %vm1643, %v1627
    %1645 = vst.msk [vmem:[#allocation2 + $0x8] sm:$0xff] %vm1643, %v1628
    %1646 = vst.msk [vmem:[#allocation2 + $0x10] sm:$0xff] %vm1643, %v1629
    %1647 = vst.msk [vmem:[#allocation2 + $0x18] sm:$0xff] %vm1643, %v1630
    %1648 = vst.msk [vmem:[#allocation2 + $0x20] sm:$0xff] %vm1643, %v1631
    %1649 = vst.msk [vmem:[#allocation2 + $0x28] sm:$0xff] %vm1643, %v1632
    %1650 = vst.msk [vmem:[#allocation2 + $0x30] sm:$0xff] %vm1643, %v1633
    %1651 = vst.msk [vmem:[#allocation2 + $0x38] sm:$0xff] %vm1643, %v1634
    %1652 = vst.msk [vmem:[#allocation2 + $0x40] sm:$0xff] %vm1643, %v1635
    %1653 = vst.msk [vmem:[#allocation2 + $0x48] sm:$0xff] %vm1643, %v1636
    %1654 = vst.msk [vmem:[#allocation2 + $0x50] sm:$0xff] %vm1643, %v1637
    %1655 = vst.msk [vmem:[#allocation2 + $0x58] sm:$0xff] %vm1643, %v1638
    %1656 = vst.msk [vmem:[#allocation2 + $0x60] sm:$0xff] %vm1643, %v1639
    %1657 = vst.msk [vmem:[#allocation2 + $0x68] sm:$0xff] %vm1643, %v1640
    %1658 = vst.msk [vmem:[#allocation2 + $0x70] sm:$0xff] %vm1643, %v1641
    %1659 = vst.msk [vmem:[#allocation2 + $0x78] sm:$0xff] %vm1643, %v1642
    %v1660 = vld [vmem:[#allocation3] sm:$0xff]
    %v1661 = vld [vmem:[#allocation3 + $0x8] sm:$0xff]
    %v1662 = vld [vmem:[#allocation3 + $0x10] sm:$0xff]
    %v1663 = vld [vmem:[#allocation3 + $0x18] sm:$0xff]
    %v1664 = vld [vmem:[#allocation3 + $0x20] sm:$0xff]
    %v1665 = vld [vmem:[#allocation3 + $0x28] sm:$0xff]
    %v1666 = vld [vmem:[#allocation3 + $0x30] sm:$0xff]
    %v1667 = vld [vmem:[#allocation3 + $0x38] sm:$0xff]
    %v1668 = vld [vmem:[#allocation3 + $0x40] sm:$0xff]
    %v1669 = vld [vmem:[#allocation3 + $0x48] sm:$0xff]
    %v1670 = vld [vmem:[#allocation3 + $0x50] sm:$0xff]
    %v1671 = vld [vmem:[#allocation3 + $0x58] sm:$0xff]
    %v1672 = vld [vmem:[#allocation3 + $0x60] sm:$0xff]
    %v1673 = vld [vmem:[#allocation3 + $0x68] sm:$0xff]
    %v1674 = vld [vmem:[#allocation3 + $0x70] sm:$0xff]
    %v1675 = vld [vmem:[#allocation3 + $0x78] sm:$0xff]
    %1692 = vrot.lane.b32.xlu0 %v837, 8
    %v1693 = vpop.permute.xlu0 %1692
    %1694 = vrot.lane.b32.xlu0 %v840, 8
    %v1695 = vpop.permute.xlu0 %1694
    %1696 = vrot.lane.b32.xlu0 %v843, 8
    %v1697 = vpop.permute.xlu0 %1696
    %1698 = vrot.lane.b32.xlu0 %v846, 8
    %v1699 = vpop.permute.xlu0 %1698
    %1700 = vrot.lane.b32.xlu0 %v849, 8
    %v1701 = vpop.permute.xlu0 %1700
    %1702 = vrot.lane.b32.xlu0 %v852, 8
    %v1703 = vpop.permute.xlu0 %1702
    %1704 = vrot.lane.b32.xlu0 %v855, 8
    %v1705 = vpop.permute.xlu0 %1704
    %1706 = vrot.lane.b32.xlu0 %v858, 8
    %v1707 = vpop.permute.xlu0 %1706
    %1708 = vrot.lane.b32.xlu0 %v861, 8
    %v1709 = vpop.permute.xlu0 %1708
    %1710 = vrot.lane.b32.xlu0 %v864, 8
    %v1711 = vpop.permute.xlu0 %1710
    %1712 = vrot.lane.b32.xlu0 %v867, 8
    %v1713 = vpop.permute.xlu0 %1712
    %1714 = vrot.lane.b32.xlu0 %v870, 8
    %v1715 = vpop.permute.xlu0 %1714
    %1716 = vrot.lane.b32.xlu0 %v873, 8
    %v1717 = vpop.permute.xlu0 %1716
    %1718 = vrot.lane.b32.xlu0 %v876, 8
    %v1719 = vpop.permute.xlu0 %1718
    %1720 = vrot.lane.b32.xlu0 %v879, 8
    %v1721 = vpop.permute.xlu0 %1720
    %1722 = vrot.lane.b32.xlu0 %v882, 8
    %v1723 = vpop.permute.xlu0 %1722
    %1756 = vrot.lane.b32.xlu0 %v1175, 16
    %v1757 = vpop.permute.xlu0 %1756
    %1758 = vrot.lane.b32.xlu0 %v1178, 16
    %v1759 = vpop.permute.xlu0 %1758
    %1760 = vrot.lane.b32.xlu0 %v1181, 16
    %v1761 = vpop.permute.xlu0 %1760
    %1762 = vrot.lane.b32.xlu0 %v1184, 16
    %v1763 = vpop.permute.xlu0 %1762
    %1764 = vrot.lane.b32.xlu0 %v1187, 16
    %v1765 = vpop.permute.xlu0 %1764
    %1766 = vrot.lane.b32.xlu0 %v1190, 16
    %v1767 = vpop.permute.xlu0 %1766
    %1768 = vrot.lane.b32.xlu0 %v1193, 16
    %v1769 = vpop.permute.xlu0 %1768
    %1770 = vrot.lane.b32.xlu0 %v1196, 16
    %v1771 = vpop.permute.xlu0 %1770
    %1772 = vrot.lane.b32.xlu0 %v1199, 16
    %v1773 = vpop.permute.xlu0 %1772
    %1774 = vrot.lane.b32.xlu0 %v1202, 16
    %v1775 = vpop.permute.xlu0 %1774
    %1776 = vrot.lane.b32.xlu0 %v1205, 16
    %v1777 = vpop.permute.xlu0 %1776
    %1778 = vrot.lane.b32.xlu0 %v1208, 16
    %v1779 = vpop.permute.xlu0 %1778
    %1780 = vrot.lane.b32.xlu0 %v1211, 16
    %v1781 = vpop.permute.xlu0 %1780
    %1782 = vrot.lane.b32.xlu0 %v1214, 16
    %v1783 = vpop.permute.xlu0 %1782
    %1784 = vrot.lane.b32.xlu0 %v1217, 16
    %v1785 = vpop.permute.xlu0 %1784
    %1786 = vrot.lane.b32.xlu0 %v1220, 16
    %v1787 = vpop.permute.xlu0 %1786
    %1820 = vrot.lane.b32.xlu0 %v1513, 24
    %v1821 = vpop.permute.xlu0 %1820
    %1822 = vrot.lane.b32.xlu0 %v1516, 24
    %v1823 = vpop.permute.xlu0 %1822
    %1824 = vrot.lane.b32.xlu0 %v1519, 24
    %v1825 = vpop.permute.xlu0 %1824
    %1826 = vrot.lane.b32.xlu0 %v1522, 24
    %v1827 = vpop.permute.xlu0 %1826
    %1828 = vrot.lane.b32.xlu0 %v1525, 24
    %v1829 = vpop.permute.xlu0 %1828
    %1830 = vrot.lane.b32.xlu0 %v1528, 24
    %v1831 = vpop.permute.xlu0 %1830
    %1832 = vrot.lane.b32.xlu0 %v1531, 24
    %v1833 = vpop.permute.xlu0 %1832
    %1834 = vrot.lane.b32.xlu0 %v1534, 24
    %v1835 = vpop.permute.xlu0 %1834
    %1836 = vrot.lane.b32.xlu0 %v1537, 24
    %v1837 = vpop.permute.xlu0 %1836
    %1838 = vrot.lane.b32.xlu0 %v1540, 24
    %v1839 = vpop.permute.xlu0 %1838
    %1840 = vrot.lane.b32.xlu0 %v1543, 24
    %v1841 = vpop.permute.xlu0 %1840
    %1842 = vrot.lane.b32.xlu0 %v1546, 24
    %v1843 = vpop.permute.xlu0 %1842
    %1844 = vrot.lane.b32.xlu0 %v1549, 24
    %v1845 = vpop.permute.xlu0 %1844
    %1846 = vrot.lane.b32.xlu0 %v1552, 24
    %v1847 = vpop.permute.xlu0 %1846
    %1848 = vrot.lane.b32.xlu0 %v1555, 24
    %v1849 = vpop.permute.xlu0 %1848
    %1850 = vrot.lane.b32.xlu0 %v1558, 24
    %v1851 = vpop.permute.xlu0 %1850
    %vm1868 = vcmask 64512
    %v1869 = vsel %vm1868, %v483, %v1693
    %v1870 = vsel %vm1868, %v486, %v1695
    %v1871 = vsel %vm1868, %v489, %v1697
    %v1872 = vsel %vm1868, %v492, %v1699
    %v1873 = vsel %vm1868, %v495, %v1701
    %v1874 = vsel %vm1868, %v498, %v1703
    %v1875 = vsel %vm1868, %v501, %v1705
    %v1876 = vsel %vm1868, %v504, %v1707
    %v1877 = vsel %vm1868, %v507, %v1709
    %v1878 = vsel %vm1868, %v510, %v1711
    %v1879 = vsel %vm1868, %v513, %v1713
    %v1880 = vsel %vm1868, %v516, %v1715
    %v1881 = vsel %vm1868, %v519, %v1717
    %v1882 = vsel %vm1868, %v522, %v1719
    %v1883 = vsel %vm1868, %v525, %v1721
    %v1884 = vsel %vm1868, %v528, %v1723
    %vm1885 = vcmask 130048
    %v1886 = vsel %vm1885, %v1869, %v1757
    %v1887 = vsel %vm1885, %v1870, %v1759
    %v1888 = vsel %vm1885, %v1871, %v1761
    %v1889 = vsel %vm1885, %v1872, %v1763
    %v1890 = vsel %vm1885, %v1873, %v1765
    %v1891 = vsel %vm1885, %v1874, %v1767
    %v1892 = vsel %vm1885, %v1875, %v1769
    %v1893 = vsel %vm1885, %v1876, %v1771
    %v1894 = vsel %vm1885, %v1877, %v1773
    %v1895 = vsel %vm1885, %v1878, %v1775
    %v1896 = vsel %vm1885, %v1879, %v1777
    %v1897 = vsel %vm1885, %v1880, %v1779
    %v1898 = vsel %vm1885, %v1881, %v1781
    %v1899 = vsel %vm1885, %v1882, %v1783
    %v1900 = vsel %vm1885, %v1883, %v1785
    %v1901 = vsel %vm1885, %v1884, %v1787
    %vm1902 = vcmask 195584
    %v1903 = vsel %vm1902, %v1886, %v1821
    %v1904 = vsel %vm1902, %v1887, %v1823
    %v1905 = vsel %vm1902, %v1888, %v1825
    %v1906 = vsel %vm1902, %v1889, %v1827
    %v1907 = vsel %vm1902, %v1890, %v1829
    %v1908 = vsel %vm1902, %v1891, %v1831
    %v1909 = vsel %vm1902, %v1892, %v1833
    %v1910 = vsel %vm1902, %v1893, %v1835
    %v1911 = vsel %vm1902, %v1894, %v1837
    %v1912 = vsel %vm1902, %v1895, %v1839
    %v1913 = vsel %vm1902, %v1896, %v1841
    %v1914 = vsel %vm1902, %v1897, %v1843
    %v1915 = vsel %vm1902, %v1898, %v1845
    %v1916 = vsel %vm1902, %v1899, %v1847
    %v1917 = vsel %vm1902, %v1900, %v1849
    %v1918 = vsel %vm1902, %v1901, %v1851
    %v1919 = vadd.f32 %v1660, %v1903
    %v1920 = vadd.f32 %v1661, %v1904
    %v1921 = vadd.f32 %v1662, %v1905
    %v1922 = vadd.f32 %v1663, %v1906
    %v1923 = vadd.f32 %v1664, %v1907
    %v1924 = vadd.f32 %v1665, %v1908
    %v1925 = vadd.f32 %v1666, %v1909
    %v1926 = vadd.f32 %v1667, %v1910
    %v1927 = vadd.f32 %v1668, %v1911
    %v1928 = vadd.f32 %v1669, %v1912
    %v1929 = vadd.f32 %v1670, %v1913
    %v1930 = vadd.f32 %v1671, %v1914
    %v1931 = vadd.f32 %v1672, %v1915
    %v1932 = vadd.f32 %v1673, %v1916
    %v1933 = vadd.f32 %v1674, %v1917
    %v1934 = vadd.f32 %v1675, %v1918
    %vm1935 = vcmask 261120
    %1936 = vst.msk [vmem:[#allocation3] sm:$0xff] %vm1935, %v1919
    %1937 = vst.msk [vmem:[#allocation3 + $0x8] sm:$0xff] %vm1935, %v1920
    %1938 = vst.msk [vmem:[#allocation3 + $0x10] sm:$0xff] %vm1935, %v1921
    %1939 = vst.msk [vmem:[#allocation3 + $0x18] sm:$0xff] %vm1935, %v1922
    %1940 = vst.msk [vmem:[#allocation3 + $0x20] sm:$0xff] %vm1935, %v1923
    %1941 = vst.msk [vmem:[#allocation3 + $0x28] sm:$0xff] %vm1935, %v1924
    %1942 = vst.msk [vmem:[#allocation3 + $0x30] sm:$0xff] %vm1935, %v1925
    %1943 = vst.msk [vmem:[#allocation3 + $0x38] sm:$0xff] %vm1935, %v1926
    %1944 = vst.msk [vmem:[#allocation3 + $0x40] sm:$0xff] %vm1935, %v1927
    %1945 = vst.msk [vmem:[#allocation3 + $0x48] sm:$0xff] %vm1935, %v1928
    %1946 = vst.msk [vmem:[#allocation3 + $0x50] sm:$0xff] %vm1935, %v1929
    %1947 = vst.msk [vmem:[#allocation3 + $0x58] sm:$0xff] %vm1935, %v1930
    %1948 = vst.msk [vmem:[#allocation3 + $0x60] sm:$0xff] %vm1935, %v1931
    %1949 = vst.msk [vmem:[#allocation3 + $0x68] sm:$0xff] %vm1935, %v1932
    %1950 = vst.msk [vmem:[#allocation3 + $0x70] sm:$0xff] %vm1935, %v1933
    %1951 = vst.msk [vmem:[#allocation3 + $0x78] sm:$0xff] %vm1935, %v1934
  $region25: #{tpu_custom_call.1} parent=0 // pred_fallthru
    _
  // Predicated region
  $region26: #{tpu_custom_call.1} parent=0 // pred_check
    %p1952 = pneg %p21
  $region27: #{tpu_custom_call.1} parent=0 // pred_check_branch
    %1954 = sbr.rel (%p1952) target = $region29
  $region28: #{tpu_custom_call.1} parent=0 // pred_region
    %v1955 = vld [vmem:[#allocation2] sm:$0xff]
    %v1956 = vld [vmem:[#allocation2 + $0x8] sm:$0xff]
    %v1957 = vld [vmem:[#allocation2 + $0x10] sm:$0xff]
    %v1958 = vld [vmem:[#allocation2 + $0x18] sm:$0xff]
    %v1959 = vld [vmem:[#allocation2 + $0x20] sm:$0xff]
    %v1960 = vld [vmem:[#allocation2 + $0x28] sm:$0xff]
    %v1961 = vld [vmem:[#allocation2 + $0x30] sm:$0xff]
    %v1962 = vld [vmem:[#allocation2 + $0x38] sm:$0xff]
    %v1963 = vld [vmem:[#allocation2 + $0x40] sm:$0xff]
    %v1964 = vld [vmem:[#allocation2 + $0x48] sm:$0xff]
    %v1965 = vld [vmem:[#allocation2 + $0x50] sm:$0xff]
    %v1966 = vld [vmem:[#allocation2 + $0x58] sm:$0xff]
    %v1967 = vld [vmem:[#allocation2 + $0x60] sm:$0xff]
    %v1968 = vld [vmem:[#allocation2 + $0x68] sm:$0xff]
    %v1969 = vld [vmem:[#allocation2 + $0x70] sm:$0xff]
    %v1970 = vld [vmem:[#allocation2 + $0x78] sm:$0xff]
    %vm1971 = vcmp.gt.f32.partialorder %v1955, 0.0
    %vm1972 = vcmp.gt.f32.partialorder %v1956, 0.0
    %vm1973 = vcmp.gt.f32.partialorder %v1957, 0.0
    %vm1974 = vcmp.gt.f32.partialorder %v1958, 0.0
    %vm1975 = vcmp.gt.f32.partialorder %v1959, 0.0
    %vm1976 = vcmp.gt.f32.partialorder %v1960, 0.0
    %vm1977 = vcmp.gt.f32.partialorder %v1961, 0.0
    %vm1978 = vcmp.gt.f32.partialorder %v1962, 0.0
    %vm1979 = vcmp.gt.f32.partialorder %v1963, 0.0
    %vm1980 = vcmp.gt.f32.partialorder %v1964, 0.0
    %vm1981 = vcmp.gt.f32.partialorder %v1965, 0.0
    %vm1982 = vcmp.gt.f32.partialorder %v1966, 0.0
    %vm1983 = vcmp.gt.f32.partialorder %v1967, 0.0
    %vm1984 = vcmp.gt.f32.partialorder %v1968, 0.0
    %vm1985 = vcmp.gt.f32.partialorder %v1969, 0.0
    %vm1986 = vcmp.gt.f32.partialorder %v1970, 0.0
    %v1987 = vsel %vm1971, %v1955, 1.0
    %v1988 = vsel %vm1972, %v1956, 1.0
    %v1989 = vsel %vm1973, %v1957, 1.0
    %v1990 = vsel %vm1974, %v1958, 1.0
    %v1991 = vsel %vm1975, %v1959, 1.0
    %v1992 = vsel %vm1976, %v1960, 1.0
    %v1993 = vsel %vm1977, %v1961, 1.0
    %v1994 = vsel %vm1978, %v1962, 1.0
    %v1995 = vsel %vm1979, %v1963, 1.0
    %v1996 = vsel %vm1980, %v1964, 1.0
    %v1997 = vsel %vm1981, %v1965, 1.0
    %v1998 = vsel %vm1982, %v1966, 1.0
    %v1999 = vsel %vm1983, %v1967, 1.0
    %v2000 = vsel %vm1984, %v1968, 1.0
    %v2001 = vsel %vm1985, %v1969, 1.0
    %v2002 = vsel %vm1986, %v1970, 1.0
    %v2003 = vrcp.pop %v1987
    %v2004 = vmul.f32 %v1987, %v2003
    %v2005 = vsub.f32 1.0, %v2004
    %v2006 = vmul.f32 %v2003, %v2005
    %v2007 = vadd.f32 %v2003, %v2006
    %vm2008 = vweird.f32 %v1987
    %vm2009 = vweird.f32 %v2003
    %vm2010 = vmor %vm2008, %vm2009
    %v2011 = vsel %vm2010, %v2003, %v2007
    %v2012 = vand.u32 2147483647, %v1987
    %vm2013 = vcmp.eq.f32.partialorder %v2012, 8.507059e+37
    %v2014 = vand.u32 %v1987, 2147483648
    %v2015 = vor.u32 1.1754944e-38, %v2014
    %v2016 = vsel %vm2013, %v2015, %v2011
    %v2017 = vmul.f32 1.0, %v2016
    %v2018 = vrcp.pop %v1988
    %v2019 = vmul.f32 %v1988, %v2018
    %v2020 = vsub.f32 1.0, %v2019
    %v2021 = vmul.f32 %v2018, %v2020
    %v2022 = vadd.f32 %v2018, %v2021
    %vm2023 = vweird.f32 %v1988
    %vm2024 = vweird.f32 %v2018
    %vm2025 = vmor %vm2023, %vm2024
    %v2026 = vsel %vm2025, %v2018, %v2022
    %v2027 = vand.u32 2147483647, %v1988
    %vm2028 = vcmp.eq.f32.partialorder %v2027, 8.507059e+37
    %v2029 = vand.u32 %v1988, 2147483648
    %v2030 = vor.u32 1.1754944e-38, %v2029
    %v2031 = vsel %vm2028, %v2030, %v2026
    %v2032 = vmul.f32 1.0, %v2031
    %v2033 = vrcp.pop %v1989
    %v2034 = vmul.f32 %v1989, %v2033
    %v2035 = vsub.f32 1.0, %v2034
    %v2036 = vmul.f32 %v2033, %v2035
    %v2037 = vadd.f32 %v2033, %v2036
    %vm2038 = vweird.f32 %v1989
    %vm2039 = vweird.f32 %v2033
    %vm2040 = vmor %vm2038, %vm2039
    %v2041 = vsel %vm2040, %v2033, %v2037
    %v2042 = vand.u32 2147483647, %v1989
    %vm2043 = vcmp.eq.f32.partialorder %v2042, 8.507059e+37
    %v2044 = vand.u32 %v1989, 2147483648
    %v2045 = vor.u32 1.1754944e-38, %v2044
    %v2046 = vsel %vm2043, %v2045, %v2041
    %v2047 = vmul.f32 1.0, %v2046
    %v2048 = vrcp.pop %v1990
    %v2049 = vmul.f32 %v1990, %v2048
    %v2050 = vsub.f32 1.0, %v2049
    %v2051 = vmul.f32 %v2048, %v2050
    %v2052 = vadd.f32 %v2048, %v2051
    %vm2053 = vweird.f32 %v1990
    %vm2054 = vweird.f32 %v2048
    %vm2055 = vmor %vm2053, %vm2054
    %v2056 = vsel %vm2055, %v2048, %v2052
    %v2057 = vand.u32 2147483647, %v1990
    %vm2058 = vcmp.eq.f32.partialorder %v2057, 8.507059e+37
    %v2059 = vand.u32 %v1990, 2147483648
    %v2060 = vor.u32 1.1754944e-38, %v2059
    %v2061 = vsel %vm2058, %v2060, %v2056
    %v2062 = vmul.f32 1.0, %v2061
    %v2063 = vrcp.pop %v1991
    %v2064 = vmul.f32 %v1991, %v2063
    %v2065 = vsub.f32 1.0, %v2064
    %v2066 = vmul.f32 %v2063, %v2065
    %v2067 = vadd.f32 %v2063, %v2066
    %vm2068 = vweird.f32 %v1991
    %vm2069 = vweird.f32 %v2063
    %vm2070 = vmor %vm2068, %vm2069
    %v2071 = vsel %vm2070, %v2063, %v2067
    %v2072 = vand.u32 2147483647, %v1991
    %vm2073 = vcmp.eq.f32.partialorder %v2072, 8.507059e+37
    %v2074 = vand.u32 %v1991, 2147483648
    %v2075 = vor.u32 1.1754944e-38, %v2074
    %v2076 = vsel %vm2073, %v2075, %v2071
    %v2077 = vmul.f32 1.0, %v2076
    %v2078 = vrcp.pop %v1992
    %v2079 = vmul.f32 %v1992, %v2078
    %v2080 = vsub.f32 1.0, %v2079
    %v2081 = vmul.f32 %v2078, %v2080
    %v2082 = vadd.f32 %v2078, %v2081
    %vm2083 = vweird.f32 %v1992
    %vm2084 = vweird.f32 %v2078
    %vm2085 = vmor %vm2083, %vm2084
    %v2086 = vsel %vm2085, %v2078, %v2082
    %v2087 = vand.u32 2147483647, %v1992
    %vm2088 = vcmp.eq.f32.partialorder %v2087, 8.507059e+37
    %v2089 = vand.u32 %v1992, 2147483648
    %v2090 = vor.u32 1.1754944e-38, %v2089
    %v2091 = vsel %vm2088, %v2090, %v2086
    %v2092 = vmul.f32 1.0, %v2091
    %v2093 = vrcp.pop %v1993
    %v2094 = vmul.f32 %v1993, %v2093
    %v2095 = vsub.f32 1.0, %v2094
    %v2096 = vmul.f32 %v2093, %v2095
    %v2097 = vadd.f32 %v2093, %v2096
    %vm2098 = vweird.f32 %v1993
    %vm2099 = vweird.f32 %v2093
    %vm2100 = vmor %vm2098, %vm2099
    %v2101 = vsel %vm2100, %v2093, %v2097
    %v2102 = vand.u32 2147483647, %v1993
    %vm2103 = vcmp.eq.f32.partialorder %v2102, 8.507059e+37
    %v2104 = vand.u32 %v1993, 2147483648
    %v2105 = vor.u32 1.1754944e-38, %v2104
    %v2106 = vsel %vm2103, %v2105, %v2101
    %v2107 = vmul.f32 1.0, %v2106
    %v2108 = vrcp.pop %v1994
    %v2109 = vmul.f32 %v1994, %v2108
    %v2110 = vsub.f32 1.0, %v2109
    %v2111 = vmul.f32 %v2108, %v2110
    %v2112 = vadd.f32 %v2108, %v2111
    %vm2113 = vweird.f32 %v1994
    %vm2114 = vweird.f32 %v2108
    %vm2115 = vmor %vm2113, %vm2114
    %v2116 = vsel %vm2115, %v2108, %v2112
    %v2117 = vand.u32 2147483647, %v1994
    %vm2118 = vcmp.eq.f32.partialorder %v2117, 8.507059e+37
    %v2119 = vand.u32 %v1994, 2147483648
    %v2120 = vor.u32 1.1754944e-38, %v2119
    %v2121 = vsel %vm2118, %v2120, %v2116
    %v2122 = vmul.f32 1.0, %v2121
    %v2123 = vrcp.pop %v1995
    %v2124 = vmul.f32 %v1995, %v2123
    %v2125 = vsub.f32 1.0, %v2124
    %v2126 = vmul.f32 %v2123, %v2125
    %v2127 = vadd.f32 %v2123, %v2126
    %vm2128 = vweird.f32 %v1995
    %vm2129 = vweird.f32 %v2123
    %vm2130 = vmor %vm2128, %vm2129
    %v2131 = vsel %vm2130, %v2123, %v2127
    %v2132 = vand.u32 2147483647, %v1995
    %vm2133 = vcmp.eq.f32.partialorder %v2132, 8.507059e+37
    %v2134 = vand.u32 %v1995, 2147483648
    %v2135 = vor.u32 1.1754944e-38, %v2134
    %v2136 = vsel %vm2133, %v2135, %v2131
    %v2137 = vmul.f32 1.0, %v2136
    %v2138 = vrcp.pop %v1996
    %v2139 = vmul.f32 %v1996, %v2138
    %v2140 = vsub.f32 1.0, %v2139
    %v2141 = vmul.f32 %v2138, %v2140
    %v2142 = vadd.f32 %v2138, %v2141
    %vm2143 = vweird.f32 %v1996
    %vm2144 = vweird.f32 %v2138
    %vm2145 = vmor %vm2143, %vm2144
    %v2146 = vsel %vm2145, %v2138, %v2142
    %v2147 = vand.u32 2147483647, %v1996
    %vm2148 = vcmp.eq.f32.partialorder %v2147, 8.507059e+37
    %v2149 = vand.u32 %v1996, 2147483648
    %v2150 = vor.u32 1.1754944e-38, %v2149
    %v2151 = vsel %vm2148, %v2150, %v2146
    %v2152 = vmul.f32 1.0, %v2151
    %v2153 = vrcp.pop %v1997
    %v2154 = vmul.f32 %v1997, %v2153
    %v2155 = vsub.f32 1.0, %v2154
    %v2156 = vmul.f32 %v2153, %v2155
    %v2157 = vadd.f32 %v2153, %v2156
    %vm2158 = vweird.f32 %v1997
    %vm2159 = vweird.f32 %v2153
    %vm2160 = vmor %vm2158, %vm2159
    %v2161 = vsel %vm2160, %v2153, %v2157
    %v2162 = vand.u32 2147483647, %v1997
    %vm2163 = vcmp.eq.f32.partialorder %v2162, 8.507059e+37
    %v2164 = vand.u32 %v1997, 2147483648
    %v2165 = vor.u32 1.1754944e-38, %v2164
    %v2166 = vsel %vm2163, %v2165, %v2161
    %v2167 = vmul.f32 1.0, %v2166
    %v2168 = vrcp.pop %v1998
    %v2169 = vmul.f32 %v1998, %v2168
    %v2170 = vsub.f32 1.0, %v2169
    %v2171 = vmul.f32 %v2168, %v2170
    %v2172 = vadd.f32 %v2168, %v2171
    %vm2173 = vweird.f32 %v1998
    %vm2174 = vweird.f32 %v2168
    %vm2175 = vmor %vm2173, %vm2174
    %v2176 = vsel %vm2175, %v2168, %v2172
    %v2177 = vand.u32 2147483647, %v1998
    %vm2178 = vcmp.eq.f32.partialorder %v2177, 8.507059e+37
    %v2179 = vand.u32 %v1998, 2147483648
    %v2180 = vor.u32 1.1754944e-38, %v2179
    %v2181 = vsel %vm2178, %v2180, %v2176
    %v2182 = vmul.f32 1.0, %v2181
    %v2183 = vrcp.pop %v1999
    %v2184 = vmul.f32 %v1999, %v2183
    %v2185 = vsub.f32 1.0, %v2184
    %v2186 = vmul.f32 %v2183, %v2185
    %v2187 = vadd.f32 %v2183, %v2186
    %vm2188 = vweird.f32 %v1999
    %vm2189 = vweird.f32 %v2183
    %vm2190 = vmor %vm2188, %vm2189
    %v2191 = vsel %vm2190, %v2183, %v2187
    %v2192 = vand.u32 2147483647, %v1999
    %vm2193 = vcmp.eq.f32.partialorder %v2192, 8.507059e+37
    %v2194 = vand.u32 %v1999, 2147483648
    %v2195 = vor.u32 1.1754944e-38, %v2194
    %v2196 = vsel %vm2193, %v2195, %v2191
    %v2197 = vmul.f32 1.0, %v2196
    %v2198 = vrcp.pop %v2000
    %v2199 = vmul.f32 %v2000, %v2198
    %v2200 = vsub.f32 1.0, %v2199
    %v2201 = vmul.f32 %v2198, %v2200
    %v2202 = vadd.f32 %v2198, %v2201
    %vm2203 = vweird.f32 %v2000
    %vm2204 = vweird.f32 %v2198
    %vm2205 = vmor %vm2203, %vm2204
    %v2206 = vsel %vm2205, %v2198, %v2202
    %v2207 = vand.u32 2147483647, %v2000
    %vm2208 = vcmp.eq.f32.partialorder %v2207, 8.507059e+37
    %v2209 = vand.u32 %v2000, 2147483648
    %v2210 = vor.u32 1.1754944e-38, %v2209
    %v2211 = vsel %vm2208, %v2210, %v2206
    %v2212 = vmul.f32 1.0, %v2211
    %v2213 = vrcp.pop %v2001
    %v2214 = vmul.f32 %v2001, %v2213
    %v2215 = vsub.f32 1.0, %v2214
    %v2216 = vmul.f32 %v2213, %v2215
    %v2217 = vadd.f32 %v2213, %v2216
    %vm2218 = vweird.f32 %v2001
    %vm2219 = vweird.f32 %v2213
    %vm2220 = vmor %vm2218, %vm2219
    %v2221 = vsel %vm2220, %v2213, %v2217
    %v2222 = vand.u32 2147483647, %v2001
    %vm2223 = vcmp.eq.f32.partialorder %v2222, 8.507059e+37
    %v2224 = vand.u32 %v2001, 2147483648
    %v2225 = vor.u32 1.1754944e-38, %v2224
    %v2226 = vsel %vm2223, %v2225, %v2221
    %v2227 = vmul.f32 1.0, %v2226
    %v2228 = vrcp.pop %v2002
    %v2229 = vmul.f32 %v2002, %v2228
    %v2230 = vsub.f32 1.0, %v2229
    %v2231 = vmul.f32 %v2228, %v2230
    %v2232 = vadd.f32 %v2228, %v2231
    %vm2233 = vweird.f32 %v2002
    %vm2234 = vweird.f32 %v2228
    %vm2235 = vmor %vm2233, %vm2234
    %v2236 = vsel %vm2235, %v2228, %v2232
    %v2237 = vand.u32 2147483647, %v2002
    %vm2238 = vcmp.eq.f32.partialorder %v2237, 8.507059e+37
    %v2239 = vand.u32 %v2002, 2147483648
    %v2240 = vor.u32 1.1754944e-38, %v2239
    %v2241 = vsel %vm2238, %v2240, %v2236
    %v2242 = vmul.f32 1.0, %v2241
    %2244 = vset.pattern.permute.xlu0 0
    %2245 = vperm.xlu0 %2244, %v2017
    %v2246 = vpop.permute.xlu0 %2245
    %2249 = vset.pattern.permute.xlu0 0
    %2250 = vperm.xlu0 %2249, %v2032
    %v2251 = vpop.permute.xlu0 %2250
    %2254 = vset.pattern.permute.xlu0 0
    %2255 = vperm.xlu0 %2254, %v2047
    %v2256 = vpop.permute.xlu0 %2255
    %2259 = vset.pattern.permute.xlu0 0
    %2260 = vperm.xlu0 %2259, %v2062
    %v2261 = vpop.permute.xlu0 %2260
    %2264 = vset.pattern.permute.xlu0 0
    %2265 = vperm.xlu0 %2264, %v2077
    %v2266 = vpop.permute.xlu0 %2265
    %2269 = vset.pattern.permute.xlu0 0
    %2270 = vperm.xlu0 %2269, %v2092
    %v2271 = vpop.permute.xlu0 %2270
    %2274 = vset.pattern.permute.xlu0 0
    %2275 = vperm.xlu0 %2274, %v2107
    %v2276 = vpop.permute.xlu0 %2275
    %2279 = vset.pattern.permute.xlu0 0
    %2280 = vperm.xlu0 %2279, %v2122
    %v2281 = vpop.permute.xlu0 %2280
    %2284 = vset.pattern.permute.xlu0 0
    %2285 = vperm.xlu0 %2284, %v2137
    %v2286 = vpop.permute.xlu0 %2285
    %2289 = vset.pattern.permute.xlu0 0
    %2290 = vperm.xlu0 %2289, %v2152
    %v2291 = vpop.permute.xlu0 %2290
    %2294 = vset.pattern.permute.xlu0 0
    %2295 = vperm.xlu0 %2294, %v2167
    %v2296 = vpop.permute.xlu0 %2295
    %2299 = vset.pattern.permute.xlu0 0
    %2300 = vperm.xlu0 %2299, %v2182
    %v2301 = vpop.permute.xlu0 %2300
    %2304 = vset.pattern.permute.xlu0 0
    %2305 = vperm.xlu0 %2304, %v2197
    %v2306 = vpop.permute.xlu0 %2305
    %2309 = vset.pattern.permute.xlu0 0
    %2310 = vperm.xlu0 %2309, %v2212
    %v2311 = vpop.permute.xlu0 %2310
    %2314 = vset.pattern.permute.xlu0 0
    %2315 = vperm.xlu0 %2314, %v2227
    %v2316 = vpop.permute.xlu0 %2315
    %2319 = vset.pattern.permute.xlu0 0
    %2320 = vperm.xlu0 %2319, %v2242
    %v2321 = vpop.permute.xlu0 %2320
    %2323 = vset.pattern.permute.xlu0 1
    %2324 = vperm.xlu0 %2323, %v2017
    %v2325 = vpop.permute.xlu0 %2324
    %2327 = vset.pattern.permute.xlu0 1
    %2328 = vperm.xlu0 %2327, %v2032
    %v2329 = vpop.permute.xlu0 %2328
    %2331 = vset.pattern.permute.xlu0 1
    %2332 = vperm.xlu0 %2331, %v2047
    %v2333 = vpop.permute.xlu0 %2332
    %2335 = vset.pattern.permute.xlu0 1
    %2336 = vperm.xlu0 %2335, %v2062
    %v2337 = vpop.permute.xlu0 %2336
    %2339 = vset.pattern.permute.xlu0 1
    %2340 = vperm.xlu0 %2339, %v2077
    %v2341 = vpop.permute.xlu0 %2340
    %2343 = vset.pattern.permute.xlu0 1
    %2344 = vperm.xlu0 %2343, %v2092
    %v2345 = vpop.permute.xlu0 %2344
    %2347 = vset.pattern.permute.xlu0 1
    %2348 = vperm.xlu0 %2347, %v2107
    %v2349 = vpop.permute.xlu0 %2348
    %2351 = vset.pattern.permute.xlu0 1
    %2352 = vperm.xlu0 %2351, %v2122
    %v2353 = vpop.permute.xlu0 %2352
    %2355 = vset.pattern.permute.xlu0 1
    %2356 = vperm.xlu0 %2355, %v2137
    %v2357 = vpop.permute.xlu0 %2356
    %2359 = vset.pattern.permute.xlu0 1
    %2360 = vperm.xlu0 %2359, %v2152
    %v2361 = vpop.permute.xlu0 %2360
    %2363 = vset.pattern.permute.xlu0 1
    %2364 = vperm.xlu0 %2363, %v2167
    %v2365 = vpop.permute.xlu0 %2364
    %2367 = vset.pattern.permute.xlu0 1
    %2368 = vperm.xlu0 %2367, %v2182
    %v2369 = vpop.permute.xlu0 %2368
    %2371 = vset.pattern.permute.xlu0 1
    %2372 = vperm.xlu0 %2371, %v2197
    %v2373 = vpop.permute.xlu0 %2372
    %2375 = vset.pattern.permute.xlu0 1
    %2376 = vperm.xlu0 %2375, %v2212
    %v2377 = vpop.permute.xlu0 %2376
    %2379 = vset.pattern.permute.xlu0 1
    %2380 = vperm.xlu0 %2379, %v2227
    %v2381 = vpop.permute.xlu0 %2380
    %2383 = vset.pattern.permute.xlu0 1
    %2384 = vperm.xlu0 %2383, %v2242
    %v2385 = vpop.permute.xlu0 %2384
    %2387 = vset.pattern.permute.xlu0 2
    %2388 = vperm.xlu0 %2387, %v2017
    %v2389 = vpop.permute.xlu0 %2388
    %2391 = vset.pattern.permute.xlu0 2
    %2392 = vperm.xlu0 %2391, %v2032
    %v2393 = vpop.permute.xlu0 %2392
    %2395 = vset.pattern.permute.xlu0 2
    %2396 = vperm.xlu0 %2395, %v2047
    %v2397 = vpop.permute.xlu0 %2396
    %2399 = vset.pattern.permute.xlu0 2
    %2400 = vperm.xlu0 %2399, %v2062
    %v2401 = vpop.permute.xlu0 %2400
    %2403 = vset.pattern.permute.xlu0 2
    %2404 = vperm.xlu0 %2403, %v2077
    %v2405 = vpop.permute.xlu0 %2404
    %2407 = vset.pattern.permute.xlu0 2
    %2408 = vperm.xlu0 %2407, %v2092
    %v2409 = vpop.permute.xlu0 %2408
    %2411 = vset.pattern.permute.xlu0 2
    %2412 = vperm.xlu0 %2411, %v2107
    %v2413 = vpop.permute.xlu0 %2412
    %2415 = vset.pattern.permute.xlu0 2
    %2416 = vperm.xlu0 %2415, %v2122
    %v2417 = vpop.permute.xlu0 %2416
    %2419 = vset.pattern.permute.xlu0 2
    %2420 = vperm.xlu0 %2419, %v2137
    %v2421 = vpop.permute.xlu0 %2420
    %2423 = vset.pattern.permute.xlu0 2
    %2424 = vperm.xlu0 %2423, %v2152
    %v2425 = vpop.permute.xlu0 %2424
    %2427 = vset.pattern.permute.xlu0 2
    %2428 = vperm.xlu0 %2427, %v2167
    %v2429 = vpop.permute.xlu0 %2428
    %2431 = vset.pattern.permute.xlu0 2
    %2432 = vperm.xlu0 %2431, %v2182
    %v2433 = vpop.permute.xlu0 %2432
    %2435 = vset.pattern.permute.xlu0 2
    %2436 = vperm.xlu0 %2435, %v2197
    %v2437 = vpop.permute.xlu0 %2436
    %2439 = vset.pattern.permute.xlu0 2
    %2440 = vperm.xlu0 %2439, %v2212
    %v2441 = vpop.permute.xlu0 %2440
    %2443 = vset.pattern.permute.xlu0 2
    %2444 = vperm.xlu0 %2443, %v2227
    %v2445 = vpop.permute.xlu0 %2444
    %2447 = vset.pattern.permute.xlu0 2
    %2448 = vperm.xlu0 %2447, %v2242
    %v2449 = vpop.permute.xlu0 %2448
    %2451 = vset.pattern.permute.xlu0 3
    %2452 = vperm.xlu0 %2451, %v2017
    %v2453 = vpop.permute.xlu0 %2452
    %2455 = vset.pattern.permute.xlu0 3
    %2456 = vperm.xlu0 %2455, %v2032
    %v2457 = vpop.permute.xlu0 %2456
    %2459 = vset.pattern.permute.xlu0 3
    %2460 = vperm.xlu0 %2459, %v2047
    %v2461 = vpop.permute.xlu0 %2460
    %2463 = vset.pattern.permute.xlu0 3
    %2464 = vperm.xlu0 %2463, %v2062
    %v2465 = vpop.permute.xlu0 %2464
    %2467 = vset.pattern.permute.xlu0 3
    %2468 = vperm.xlu0 %2467, %v2077
    %v2469 = vpop.permute.xlu0 %2468
    %2471 = vset.pattern.permute.xlu0 3
    %2472 = vperm.xlu0 %2471, %v2092
    %v2473 = vpop.permute.xlu0 %2472
    %2475 = vset.pattern.permute.xlu0 3
    %2476 = vperm.xlu0 %2475, %v2107
    %v2477 = vpop.permute.xlu0 %2476
    %2479 = vset.pattern.permute.xlu0 3
    %2480 = vperm.xlu0 %2479, %v2122
    %v2481 = vpop.permute.xlu0 %2480
    %2483 = vset.pattern.permute.xlu0 3
    %2484 = vperm.xlu0 %2483, %v2137
    %v2485 = vpop.permute.xlu0 %2484
    %2487 = vset.pattern.permute.xlu0 3
    %2488 = vperm.xlu0 %2487, %v2152
    %v2489 = vpop.permute.xlu0 %2488
    %2491 = vset.pattern.permute.xlu0 3
    %2492 = vperm.xlu0 %2491, %v2167
    %v2493 = vpop.permute.xlu0 %2492
    %2495 = vset.pattern.permute.xlu0 3
    %2496 = vperm.xlu0 %2495, %v2182
    %v2497 = vpop.permute.xlu0 %2496
    %2499 = vset.pattern.permute.xlu0 3
    %2500 = vperm.xlu0 %2499, %v2197
    %v2501 = vpop.permute.xlu0 %2500
    %2503 = vset.pattern.permute.xlu0 3
    %2504 = vperm.xlu0 %2503, %v2212
    %v2505 = vpop.permute.xlu0 %2504
    %2507 = vset.pattern.permute.xlu0 3
    %2508 = vperm.xlu0 %2507, %v2227
    %v2509 = vpop.permute.xlu0 %2508
    %2511 = vset.pattern.permute.xlu0 3
    %2512 = vperm.xlu0 %2511, %v2242
    %v2513 = vpop.permute.xlu0 %2512
    %vm2515 = vcmask 64512
    %v2516 = vsel %vm2515, %v2246, %v2325
    %v2517 = vsel %vm2515, %v2251, %v2329
    %v2518 = vsel %vm2515, %v2256, %v2333
    %v2519 = vsel %vm2515, %v2261, %v2337
    %v2520 = vsel %vm2515, %v2266, %v2341
    %v2521 = vsel %vm2515, %v2271, %v2345
    %v2522 = vsel %vm2515, %v2276, %v2349
    %v2523 = vsel %vm2515, %v2281, %v2353
    %v2524 = vsel %vm2515, %v2286, %v2357
    %v2525 = vsel %vm2515, %v2291, %v2361
    %v2526 = vsel %vm2515, %v2296, %v2365
    %v2527 = vsel %vm2515, %v2301, %v2369
    %v2528 = vsel %vm2515, %v2306, %v2373
    %v2529 = vsel %vm2515, %v2311, %v2377
    %v2530 = vsel %vm2515, %v2316, %v2381
    %v2531 = vsel %vm2515, %v2321, %v2385
    %vm2532 = vcmask 130048
    %v2533 = vsel %vm2532, %v2516, %v2389
    %v2534 = vsel %vm2532, %v2517, %v2393
    %v2535 = vsel %vm2532, %v2518, %v2397
    %v2536 = vsel %vm2532, %v2519, %v2401
    %v2537 = vsel %vm2532, %v2520, %v2405
    %v2538 = vsel %vm2532, %v2521, %v2409
    %v2539 = vsel %vm2532, %v2522, %v2413
    %v2540 = vsel %vm2532, %v2523, %v2417
    %v2541 = vsel %vm2532, %v2524, %v2421
    %v2542 = vsel %vm2532, %v2525, %v2425
    %v2543 = vsel %vm2532, %v2526, %v2429
    %v2544 = vsel %vm2532, %v2527, %v2433
    %v2545 = vsel %vm2532, %v2528, %v2437
    %v2546 = vsel %vm2532, %v2529, %v2441
    %v2547 = vsel %vm2532, %v2530, %v2445
    %v2548 = vsel %vm2532, %v2531, %v2449
    %vm2549 = vcmask 195584
    %v2550 = vsel %vm2549, %v2533, %v2453
    %v2551 = vsel %vm2549, %v2534, %v2457
    %v2552 = vsel %vm2549, %v2535, %v2461
    %v2553 = vsel %vm2549, %v2536, %v2465
    %v2554 = vsel %vm2549, %v2537, %v2469
    %v2555 = vsel %vm2549, %v2538, %v2473
    %v2556 = vsel %vm2549, %v2539, %v2477
    %v2557 = vsel %vm2549, %v2540, %v2481
    %v2558 = vsel %vm2549, %v2541, %v2485
    %v2559 = vsel %vm2549, %v2542, %v2489
    %v2560 = vsel %vm2549, %v2543, %v2493
    %v2561 = vsel %vm2549, %v2544, %v2497
    %v2562 = vsel %vm2549, %v2545, %v2501
    %v2563 = vsel %vm2549, %v2546, %v2505
    %v2564 = vsel %vm2549, %v2547, %v2509
    %v2565 = vsel %vm2549, %v2548, %v2513
    %v2566 = vld [vmem:[#allocation3] sm:$0xff]
    %v2567 = vld [vmem:[#allocation3 + $0x8] sm:$0xff]
    %v2568 = vld [vmem:[#allocation3 + $0x10] sm:$0xff]
    %v2569 = vld [vmem:[#allocation3 + $0x18] sm:$0xff]
    %v2570 = vld [vmem:[#allocation3 + $0x20] sm:$0xff]
    %v2571 = vld [vmem:[#allocation3 + $0x28] sm:$0xff]
    %v2572 = vld [vmem:[#allocation3 + $0x30] sm:$0xff]
    %v2573 = vld [vmem:[#allocation3 + $0x38] sm:$0xff]
    %v2574 = vld [vmem:[#allocation3 + $0x40] sm:$0xff]
    %v2575 = vld [vmem:[#allocation3 + $0x48] sm:$0xff]
    %v2576 = vld [vmem:[#allocation3 + $0x50] sm:$0xff]
    %v2577 = vld [vmem:[#allocation3 + $0x58] sm:$0xff]
    %v2578 = vld [vmem:[#allocation3 + $0x60] sm:$0xff]
    %v2579 = vld [vmem:[#allocation3 + $0x68] sm:$0xff]
    %v2580 = vld [vmem:[#allocation3 + $0x70] sm:$0xff]
    %v2581 = vld [vmem:[#allocation3 + $0x78] sm:$0xff]
    %v2582 = vmul.f32 %v2566, %v2550
    %v2583 = vmul.f32 %v2567, %v2551
    %v2584 = vmul.f32 %v2568, %v2552
    %v2585 = vmul.f32 %v2569, %v2553
    %v2586 = vmul.f32 %v2570, %v2554
    %v2587 = vmul.f32 %v2571, %v2555
    %v2588 = vmul.f32 %v2572, %v2556
    %v2589 = vmul.f32 %v2573, %v2557
    %v2590 = vmul.f32 %v2574, %v2558
    %v2591 = vmul.f32 %v2575, %v2559
    %v2592 = vmul.f32 %v2576, %v2560
    %v2593 = vmul.f32 %v2577, %v2561
    %v2594 = vmul.f32 %v2578, %v2562
    %v2595 = vmul.f32 %v2579, %v2563
    %v2596 = vmul.f32 %v2580, %v2564
    %v2597 = vmul.f32 %v2581, %v2565
    %vm2598 = vcmp.gt.f32.partialorder %v2582, 0.0
    %vm2599 = vcmp.gt.f32.partialorder %v2583, 0.0
    %vm2600 = vcmp.gt.f32.partialorder %v2584, 0.0
    %vm2601 = vcmp.gt.f32.partialorder %v2585, 0.0
    %vm2602 = vcmp.gt.f32.partialorder %v2586, 0.0
    %vm2603 = vcmp.gt.f32.partialorder %v2587, 0.0
    %vm2604 = vcmp.gt.f32.partialorder %v2588, 0.0
    %vm2605 = vcmp.gt.f32.partialorder %v2589, 0.0
    %vm2606 = vcmp.gt.f32.partialorder %v2590, 0.0
    %vm2607 = vcmp.gt.f32.partialorder %v2591, 0.0
    %vm2608 = vcmp.gt.f32.partialorder %v2592, 0.0
    %vm2609 = vcmp.gt.f32.partialorder %v2593, 0.0
    %vm2610 = vcmp.gt.f32.partialorder %v2594, 0.0
    %vm2611 = vcmp.gt.f32.partialorder %v2595, 0.0
    %vm2612 = vcmp.gt.f32.partialorder %v2596, 0.0
    %vm2613 = vcmp.gt.f32.partialorder %v2597, 0.0
    %v2614 = vmul.f32 %v2582, 1.442695
    %v2615 = vpow.pop %v2614
    %v2616 = vmul.f32 %v2583, 1.442695
    %v2617 = vpow.pop %v2616
    %v2618 = vmul.f32 %v2584, 1.442695
    %v2619 = vpow.pop %v2618
    %v2620 = vmul.f32 %v2585, 1.442695
    %v2621 = vpow.pop %v2620
    %v2622 = vmul.f32 %v2586, 1.442695
    %v2623 = vpow.pop %v2622
    %v2624 = vmul.f32 %v2587, 1.442695
    %v2625 = vpow.pop %v2624
    %v2626 = vmul.f32 %v2588, 1.442695
    %v2627 = vpow.pop %v2626
    %v2628 = vmul.f32 %v2589, 1.442695
    %v2629 = vpow.pop %v2628
    %v2630 = vmul.f32 %v2590, 1.442695
    %v2631 = vpow.pop %v2630
    %v2632 = vmul.f32 %v2591, 1.442695
    %v2633 = vpow.pop %v2632
    %v2634 = vmul.f32 %v2592, 1.442695
    %v2635 = vpow.pop %v2634
    %v2636 = vmul.f32 %v2593, 1.442695
    %v2637 = vpow.pop %v2636
    %v2638 = vmul.f32 %v2594, 1.442695
    %v2639 = vpow.pop %v2638
    %v2640 = vmul.f32 %v2595, 1.442695
    %v2641 = vpow.pop %v2640
    %v2642 = vmul.f32 %v2596, 1.442695
    %v2643 = vpow.pop %v2642
    %v2644 = vmul.f32 %v2597, 1.442695
    %v2645 = vpow.pop %v2644
    %v2646 = vsub.f32 %v2615, 1.0
    %v2647 = vsub.f32 %v2617, 1.0
    %v2648 = vsub.f32 %v2619, 1.0
    %v2649 = vsub.f32 %v2621, 1.0
    %v2650 = vsub.f32 %v2623, 1.0
    %v2651 = vsub.f32 %v2625, 1.0
    %v2652 = vsub.f32 %v2627, 1.0
    %v2653 = vsub.f32 %v2629, 1.0
    %v2654 = vsub.f32 %v2631, 1.0
    %v2655 = vsub.f32 %v2633, 1.0
    %v2656 = vsub.f32 %v2635, 1.0
    %v2657 = vsub.f32 %v2637, 1.0
    %v2658 = vsub.f32 %v2639, 1.0
    %v2659 = vsub.f32 %v2641, 1.0
    %v2660 = vsub.f32 %v2643, 1.0
    %v2661 = vsub.f32 %v2645, 1.0
    %v2662 = vsel %vm2598, %v2582, %v2646
    %v2663 = vsel %vm2599, %v2583, %v2647
    %v2664 = vsel %vm2600, %v2584, %v2648
    %v2665 = vsel %vm2601, %v2585, %v2649
    %v2666 = vsel %vm2602, %v2586, %v2650
    %v2667 = vsel %vm2603, %v2587, %v2651
    %v2668 = vsel %vm2604, %v2588, %v2652
    %v2669 = vsel %vm2605, %v2589, %v2653
    %v2670 = vsel %vm2606, %v2590, %v2654
    %v2671 = vsel %vm2607, %v2591, %v2655
    %v2672 = vsel %vm2608, %v2592, %v2656
    %v2673 = vsel %vm2609, %v2593, %v2657
    %v2674 = vsel %vm2610, %v2594, %v2658
    %v2675 = vsel %vm2611, %v2595, %v2659
    %v2676 = vsel %vm2612, %v2596, %v2660
    %v2677 = vsel %vm2613, %v2597, %v2661
    %vm2678 = vcmask 261120
    %2679 = vst.msk [vmem:[%s5] sm:$0xff] %vm2678, %v2662
    %2680 = vst.msk [vmem:[%s5 + $0x8] sm:$0xff] %vm2678, %v2663
    %2681 = vst.msk [vmem:[%s5 + $0x10] sm:$0xff] %vm2678, %v2664
    %2682 = vst.msk [vmem:[%s5 + $0x18] sm:$0xff] %vm2678, %v2665
    %2683 = vst.msk [vmem:[%s5 + $0x20] sm:$0xff] %vm2678, %v2666
    %2684 = vst.msk [vmem:[%s5 + $0x28] sm:$0xff] %vm2678, %v2667
    %2685 = vst.msk [vmem:[%s5 + $0x30] sm:$0xff] %vm2678, %v2668
    %2686 = vst.msk [vmem:[%s5 + $0x38] sm:$0xff] %vm2678, %v2669
    %2687 = vst.msk [vmem:[%s5 + $0x40] sm:$0xff] %vm2678, %v2670
    %2688 = vst.msk [vmem:[%s5 + $0x48] sm:$0xff] %vm2678, %v2671
    %2689 = vst.msk [vmem:[%s5 + $0x50] sm:$0xff] %vm2678, %v2672
    %2690 = vst.msk [vmem:[%s5 + $0x58] sm:$0xff] %vm2678, %v2673
    %2691 = vst.msk [vmem:[%s5 + $0x60] sm:$0xff] %vm2678, %v2674
    %2692 = vst.msk [vmem:[%s5 + $0x68] sm:$0xff] %vm2678, %v2675
    %2693 = vst.msk [vmem:[%s5 + $0x70] sm:$0xff] %vm2678, %v2676
    %2694 = vst.msk [vmem:[%s5 + $0x78] sm:$0xff] %vm2678, %v2677
  $region29: #{tpu_custom_call.1} parent=0 // pred_fallthru
    _
  // Predicated region
  $region30: #{tpu_custom_call.1} parent=0 // pred_check
    _
  $region31: #{tpu_custom_call.1} parent=0 // pred_check_branch
    %2696 = sbr.rel (0) target = $region33
  $region32: #{tpu_custom_call.1} parent=0 // pred_region
    _
  $region33: #{tpu_custom_call.1} parent=0 // pred_fallthru
    _
  // Predicated region
  $region34: #{tpu_custom_call.1} parent=0 // pred_check
    _
  $region35: #{tpu_custom_call.1} parent=0 // pred_check_branch
    %2698 = sbr.rel (0) target = $region37
  $region36: #{tpu_custom_call.1} parent=0 // pred_region
    _
  $region37: #{tpu_custom_call.1} parent=0 // pred_fallthru
    _

</llo_original>
